<compile_context>
chip_gen: v6e
topology: v6e:2x2x1
jax: 0.10.0
libtpu: 0.0.40
codegen_flags: <defaults>
</compile_context>

<pallas_src>
import math
import functools

import numpy as np
import jax
import jax.numpy as jnp
from jax import lax
from jax.experimental import pallas as pl
from jax.experimental.pallas import tpu as pltpu

# ---------------- config (small, consistent with the module) ----------------
BATCH = 2
SEQ = 8
DIM = 128
N_HEADS = 4
HEAD_DIM = DIM // N_HEADS          # 32
HIDDEN = 256                        # FeedForward hidden_dim
WINDOW = 4                          # sliding-window size
EPS = 1e-5


# ------------------------------- kernel -------------------------------------
def transformer_block_kernel(
    x_ref,        # (bb, S, D)          f32
    norms_ref,    # (2, D)              f32   [attn_norm.weight ; ffn_norm.weight]
    wproj_ref,    # (D, 5D)             bf16  [wq*s | wk | wv | wq*s@R | wk@R]
    wo_ref,       # (D, D)              bf16
    w13_ref,      # (D, 2*HIDDEN)       bf16  [w1 | w3]
    w2_ref,       # (HIDDEN, D)         bf16
    cos_ref,      # (bb*S, D)           f32   interleave-duplicated, pre-tiled
    sin_ref,      # (bb*S, D)           f32
    hmask_ref,    # (H*bb*S, D)         f32   0/1 head-select mask
    bias_ref,     # (H*bb*S, bb*S)      f32   0 / -1e30 sliding-window bias
    o_ref,        # (bb, S, D)
    *, bb,
):
    rows_x = bb * SEQ                 # all query/key rows handled in this block
    rows_s = N_HEADS * rows_x         # head-stacked score rows

    x = x_ref[...].reshape(rows_x, DIM)          # leading-dim reshape only
    norms = norms_ref[...]

    def rmsnorm(v, w):                # matches RMSNorm.forward (f32 math)
        var = jnp.mean(v * v, axis=-1, keepdims=True)
        return v * jax.lax.rsqrt(var + EPS) * w

    # ---------------- attention branch ----------------
    xn = rmsnorm(x, norms[0:1, :]).astype(jnp.bfloat16)
    proj = jnp.dot(xn, wproj_ref[...],
                   preferred_element_type=jnp.float32)          # (rows_x, 5D)
    q = proj[:, 0 * DIM:1 * DIM]
    k = proj[:, 1 * DIM:2 * DIM]
    v = proj[:, 2 * DIM:3 * DIM]
    q_sw = proj[:, 3 * DIM:4 * DIM]                              # q @ R (pair swap)
    k_sw = proj[:, 4 * DIM:5 * DIM]                              # k @ R

    # interleaved RoPE: pair-swap folded into weights -> pure FMAs.
    # 1/sqrt(head_dim) already folded into the q columns of wproj.
    cos = cos_ref[...]
    sin = sin_ref[...]
    q = q * cos + q_sw * sin
    k = k * cos + k_sw * sin

    # stack heads along sublanes (row r = h*rows_x + b*S + i) via a single
    # broadcast-multiply against the host-precomputed 0/1 head mask.
    hmask = hmask_ref[...]
    q_stacked = (jnp.broadcast_to(q[None, :, :], (N_HEADS, rows_x, DIM))
                 .reshape(rows_s, DIM) * hmask)

    # all heads' (and batches') scores in ONE MXU call: (rows_s, D) @ (rows_x, D)^T
    scores = lax.dot_general(
        q_stacked.astype(jnp.bfloat16), k.astype(jnp.bfloat16),
        dimension_numbers=(((1,), (1,)), ((), ())),
        preferred_element_type=jnp.float32)                      # (rows_s, rows_x)

    # additive sliding-window (+ same-sequence) mask, host-precomputed.
    scores = scores + bias_ref[...]

    m = jnp.max(scores, axis=-1, keepdims=True)
    p = jnp.exp(scores - m)
    p = p * pl.reciprocal(jnp.sum(p, axis=-1, keepdims=True), approx=True)

    ctx = jnp.dot(p.astype(jnp.bfloat16), v.astype(jnp.bfloat16),
                  preferred_element_type=jnp.float32)            # (rows_s, D)
    ctx = ctx * hmask
    attn = ctx[0:rows_x]
    for h in range(1, N_HEADS):                                  # 3 vector adds
        attn = attn + ctx[h * rows_x:(h + 1) * rows_x]

    attn = jnp.dot(attn.astype(jnp.bfloat16), wo_ref[...],
                   preferred_element_type=jnp.float32)
    h1 = x + attn                                                # residual 1

    # ---------------- feed-forward branch (SwiGLU) ----------------
    hn = rmsnorm(h1, norms[1:2, :]).astype(jnp.bfloat16)
    h13 = jnp.dot(hn, w13_ref[...],
                  preferred_element_type=jnp.float32)            # (rows_x, 2*HIDDEN)
    a = h13[:, :HIDDEN]
    g = h13[:, HIDDEN:]
    swiglu = (a * jax.nn.sigmoid(a)) * g
    ffn = jnp.dot(swiglu.astype(jnp.bfloat16), w2_ref[...],
                  preferred_element_type=jnp.float32)

    o_ref[...] = (h1 + ffn).reshape(bb, SEQ, DIM).astype(o_ref.dtype)  # residual 2


# ------------------------------ wrapper --------------------------------------
@functools.partial(jax.jit, static_argnames=("bb",))
def transformer_block(x, fused, consts, *, bb):
    B, S, D = x.shape
    rows_x = bb * S
    rows_s = N_HEADS * rows_x
    steps = B // bb
    kernel = functools.partial(transformer_block_kernel, bb=bb)
    full = lambda shape: pl.BlockSpec(shape, lambda i: (0,) * len(shape))

    # advisory cost estimate for XLA's scheduler (whole call, all grid steps)
    flops = steps * (
        2 * rows_x * (DIM * 5 * DIM + DIM * DIM + DIM * 2 * HIDDEN + HIDDEN * DIM)
        + 2 * 2 * rows_s * rows_x * DIM)                         # qk^T + pv
    transcendentals = steps * (rows_s * rows_x + rows_x * HIDDEN + rows_s + 2 * rows_x)
    bytes_w = 2 * (DIM * 5 * DIM + DIM * DIM + DIM * 2 * HIDDEN + HIDDEN * DIM)
    bytes_act = 4 * 2 * B * S * DIM
    bytes_const = 4 * (2 * DIM + 2 * rows_x * DIM + rows_s * DIM + rows_s * rows_x)
    cost = pl.CostEstimate(flops=int(flops),
                           transcendentals=int(transcendentals),
                           bytes_accessed=int(bytes_w + bytes_act + bytes_const))

    return pl.pallas_call(
        kernel,
        out_shape=jax.ShapeDtypeStruct((B, S, D), x.dtype),
        grid=(steps,),
        in_specs=[
            pl.BlockSpec((bb, S, D), lambda i: (i, 0, 0)),       # x
            full((2, D)),                                        # norm weights
            full((D, 5 * D)),                                    # fused qkv + rope-swap
            full((D, D)),                                        # wo
            full((D, 2 * HIDDEN)),                               # fused w1|w3
            full((HIDDEN, D)),                                   # w2
            full((rows_x, D)),                                   # cos (pre-tiled)
            full((rows_x, D)),                                   # sin (pre-tiled)
            full((rows_s, D)),                                   # head-select mask
            full((rows_s, rows_x)),                              # sliding-window bias
        ],
        out_specs=pl.BlockSpec((bb, S, D), lambda i: (i, 0, 0)),
        input_output_aliases={0: 0},                             # o aliases x
        cost_estimate=cost,
        compiler_params=pltpu.CompilerParams(
            dimension_semantics=("parallel",)),
    )(x, fused["norms"], fused["w_proj"], fused["wo"], fused["w13"], fused["w2"],
      consts["cos"], consts["sin"], consts["head_mask"], consts["bias"])


def _pick_block_batch(batch, seq):
    """Shard the batch across TensorCores only when per-core work is big enough
    to amortize the per-step overhead and duplicated weight DMA. At B=2/S=8 the
    whole batch always folds into a single grid step (bb=B, grid=(1,))."""
    try:
        kind = jax.devices()[0].device_kind.lower()
    except Exception:
        kind = ""
    multi_tc = ("v7" in kind) or ("7x" in kind)
    if multi_tc and batch % 2 == 0 and (batch // 2) * seq >= 128:
        return batch // 2
    return batch


# --------------------------- parameter / input setup --------------------------
def make_params(key):
    ks = jax.random.split(key, 8)
    scale = 0.02
    return {
        # Linear weights stored pre-transposed: (in, out)
        "wq": scale * jax.random.normal(ks[0], (DIM, DIM), jnp.float32),
        "wk": scale * jax.random.normal(ks[1], (DIM, DIM), jnp.float32),
        "wv": scale * jax.random.normal(ks[2], (DIM, DIM), jnp.float32),
        "wo": scale * jax.random.normal(ks[3], (DIM, DIM), jnp.float32),
        "w1": scale * jax.random.normal(ks[4], (DIM, HIDDEN), jnp.float32),
        "w2": scale * jax.random.normal(ks[5], (HIDDEN, DIM), jnp.float32),
        "w3": scale * jax.random.normal(ks[6], (DIM, HIDDEN), jnp.float32),
        "attn_norm_w": jnp.ones((1, DIM), jnp.float32),
        "ffn_norm_w": jnp.ones((1, DIM), jnp.float32),
    }


def _pair_swap_matrix(dim):
    # R such that (t @ R)[2i] = -t[2i+1], (t @ R)[2i+1] = t[2i]
    src = jnp.arange(dim)[:, None]
    dst = jnp.arange(dim)[None, :]
    plus = ((dst % 2) == 1) & (src == dst - 1)
    minus = ((dst % 2) == 0) & (src == dst + 1)
    return plus.astype(jnp.float32) - minus.astype(jnp.float32)


def fuse_params(params):
    """Host-side prep: fuse qkv / w1-w3, fold RoPE pair-swap and 1/sqrt(hd)
    into the projection weight, cast MXU operands to bf16."""
    scale = 1.0 / math.sqrt(HEAD_DIM)
    R = _pair_swap_matrix(DIM)
    wq = params["wq"] * scale
    wk = params["wk"]
    w_proj = jnp.concatenate([wq, wk, params["wv"], wq @ R, wk @ R], axis=1)
    return {
        "norms": jnp.concatenate([params["attn_norm_w"], params["ffn_norm_w"]], axis=0),
        "w_proj": w_proj.astype(jnp.bfloat16),
        "wo": params["wo"].astype(jnp.bfloat16),
        "w13": jnp.concatenate([params["w1"], params["w3"]], axis=1).astype(jnp.bfloat16),
        "w2": params["w2"].astype(jnp.bfloat16),
    }


def make_rope_tables(seq_len, head_dim, n_heads, theta=10000.0):
    freqs = 1.0 / (theta ** (np.arange(0, head_dim, 2, dtype=np.float32) / head_dim))
    ang = np.outer(np.arange(seq_len, dtype=np.float32), freqs)      # (S, hd/2)
    cos_full = np.tile(np.repeat(np.cos(ang), 2, axis=-1), (1, n_heads))
    sin_full = np.tile(np.repeat(np.sin(ang), 2, axis=-1), (1, n_heads))
    return cos_full.astype(np.float32), sin_full.astype(np.float32)  # (S, D) each


def make_constants(bb):
    """All grid-invariant kernel constants, precomputed on host (<40 KB total)."""
    rows_x = bb * SEQ
    rows_s = N_HEADS * rows_x

    cos_full, sin_full = make_rope_tables(SEQ, HEAD_DIM, N_HEADS)
    cos = np.tile(cos_full, (bb, 1))                                 # (bb*S, D)
    sin = np.tile(sin_full, (bb, 1))

    # head-select mask: row r = h*rows_x + ..., lanes [h*hd, (h+1)*hd) active
    head_row = np.arange(rows_s)[:, None] // rows_x
    head_lane = np.arange(DIM)[None, :] // HEAD_DIM
    head_mask = (head_row == head_lane).astype(np.float32)           # (rows_s, D)

    # additive sliding-window + same-sequence bias
    ri = np.arange(rows_s)[:, None]
    ci = np.arange(rows_x)[None, :]
    q_b = (ri // SEQ) % bb
    q_i = ri % SEQ
    k_b = ci // SEQ
    k_j = ci % SEQ
    allowed = (q_b == k_b) & (k_j <= q_i) & (k_j > q_i - WINDOW)
    bias = np.where(allowed, 0.0, -1e30).astype(np.float32)          # (rows_s, rows_x)

    return {
        "cos": jnp.asarray(cos),
        "sin": jnp.asarray(sin),
        "head_mask": jnp.asarray(head_mask),
        "bias": jnp.asarray(bias),
    }


# --------------------------- pure-JAX reference -------------------------------
def reference_block(x, params):
    def rms(v, w):
        var = jnp.mean(v * v, axis=-1, keepdims=True)
        return v * jax.lax.rsqrt(var + EPS) * w

    B, S, D = x.shape
    anw = params["attn_norm_w"][0]
    fnw = params["ffn_norm_w"][0]

    xn = rms(x, anw)
    q = (xn @ params["wq"]).reshape(B, S, N_HEADS, HEAD_DIM)
    k = (xn @ params["wk"]).reshape(B, S, N_HEADS, HEAD_DIM)
    v = (xn @ params["wv"]).reshape(B, S, N_HEADS, HEAD_DIM)

    freqs = 1.0 / (10000.0 ** (jnp.arange(0, HEAD_DIM, 2, dtype=jnp.float32) / HEAD_DIM))
    ang = jnp.outer(jnp.arange(S, dtype=jnp.float32), freqs)
    cos = jnp.cos(ang)[None, :, None, :]
    sin = jnp.sin(ang)[None, :, None, :]

    def rope(t):
        tr = t.reshape(B, S, N_HEADS, HEAD_DIM // 2, 2)
        t0, t1 = tr[..., 0], tr[..., 1]
        return jnp.stack([t0 * cos - t1 * sin, t1 * cos + t0 * sin],
                         axis=-1).reshape(B, S, N_HEADS, HEAD_DIM)

    q, k = rope(q), rope(k)
    s = jnp.einsum("bqhd,bkhd->bhqk", q, k) / math.sqrt(HEAD_DIM)
    i = jnp.arange(S)[:, None]
    j = jnp.arange(S)[None, :]
    allowed = (j <= i) & (j >= i - WINDOW + 1)
    s = jnp.where(allowed[None, None], s, -1e30)
    p = jax.nn.softmax(s, axis=-1)
    ctx = jnp.einsum("bhqk,bkhd->bqhd", p, v).reshape(B, S, D)
    h1 = x + ctx @ params["wo"]

    hn = rms(h1, fnw)
    a = hn @ params["w1"]
    g = hn @ params["w3"]
    return h1 + (a * jax.nn.sigmoid(a) * g) @ params["w2"]


# ---------------------------------- main --------------------------------------
if __name__ == "__main__":
    key = jax.random.PRNGKey(0)
    k_x, k_p = jax.random.split(key)

    x = jax.random.normal(k_x, (BATCH, SEQ, DIM), jnp.float32)
    params = make_params(k_p)
    fused = fuse_params(params)
    bb = _pick_block_batch(BATCH, SEQ)
    consts = make_constants(bb)

    out = transformer_block(x, fused, consts, bb=bb)
    out = jax.block_until_ready(out)

    assert out.shape == (BATCH, SEQ, DIM)
    assert bool(jnp.all(jnp.isfinite(out)))

    ref = reference_block(x, params)
    max_diff = float(jnp.max(jnp.abs(out - ref)))
    assert max_diff < 5e-2, f"kernel deviates from reference: {max_diff}"

    # TODO(synk): dropout (p=0.0) and the padding-mask / cross-attention paths
    # are no-ops / unused in this configuration and are not implemented.
    print("KERNEL_OK")
</pallas_src>

<mosaic_0001>
module attributes {stable_mosaic.version = 11 : i64} {
  func.func @transformer_block_kernel(%arg0: i32, %arg1: memref<2x8x128xf32, #tpu.memory_space<vmem>>, %arg2: memref<2x128xf32, #tpu.memory_space<vmem>>, %arg3: memref<128x640xbf16, #tpu.memory_space<vmem>>, %arg4: memref<128x128xbf16, #tpu.memory_space<vmem>>, %arg5: memref<128x512xbf16, #tpu.memory_space<vmem>>, %arg6: memref<256x128xbf16, #tpu.memory_space<vmem>>, %arg7: memref<16x128xf32, #tpu.memory_space<vmem>>, %arg8: memref<16x128xf32, #tpu.memory_space<vmem>>, %arg9: memref<64x128xf32, #tpu.memory_space<vmem>>, %arg10: memref<64x16xf32, #tpu.memory_space<vmem>>, %arg11: memref<2x8x128xf32, #tpu.memory_space<vmem>>) attributes {dimension_semantics = [#tpu.dimension_semantics<parallel>], iteration_bounds = array<i64: 1>, scalar_prefetch = 0 : i64, scratch_operands = 0 : i64, tpu.core_type = #tpu.core_type<tc>, window_params = [{transform_indices = @transform_0, window_bounds = array<i64: 2, 8, 128>}, {pipeline_mode = #tpu.pipeline_mode<synchronous>, transform_indices = @transform_1, window_bounds = array<i64: 2, 128>}, {pipeline_mode = #tpu.pipeline_mode<synchronous>, transform_indices = @transform_2, window_bounds = array<i64: 128, 640>}, {pipeline_mode = #tpu.pipeline_mode<synchronous>, transform_indices = @transform_3, window_bounds = array<i64: 128, 128>}, {pipeline_mode = #tpu.pipeline_mode<synchronous>, transform_indices = @transform_4, window_bounds = array<i64: 128, 512>}, {pipeline_mode = #tpu.pipeline_mode<synchronous>, transform_indices = @transform_5, window_bounds = array<i64: 256, 128>}, {pipeline_mode = #tpu.pipeline_mode<synchronous>, transform_indices = @transform_6, window_bounds = array<i64: 16, 128>}, {pipeline_mode = #tpu.pipeline_mode<synchronous>, transform_indices = @transform_7, window_bounds = array<i64: 16, 128>}, {pipeline_mode = #tpu.pipeline_mode<synchronous>, transform_indices = @transform_8, window_bounds = array<i64: 64, 128>}, {pipeline_mode = #tpu.pipeline_mode<synchronous>, transform_indices = @transform_9, window_bounds = array<i64: 64, 16>}, {transform_indices = @transform_10, window_bounds = array<i64: 2, 8, 128>}]} {
    %c0 = arith.constant 0 : index
    %c0_0 = arith.constant 0 : index
    %c0_1 = arith.constant 0 : index
    %0 = vector.load %arg1[%c0, %c0_0, %c0_1] : memref<2x8x128xf32, #tpu.memory_space<vmem>>, vector<2x8x128xf32>
    %1 = vector.shape_cast %0 : vector<2x8x128xf32> to vector<16x128xf32>
    %c0_2 = arith.constant 0 : index
    %c0_3 = arith.constant 0 : index
    %2 = vector.load %arg2[%c0_2, %c0_3] : memref<2x128xf32, #tpu.memory_space<vmem>>, vector<2x128xf32>
    %3 = vector.extract_strided_slice %2 {offsets = [0, 0], sizes = [1, 128], strides = [1, 1]} : vector<2x128xf32> to vector<1x128xf32>
    %4 = arith.mulf %1, %1 : vector<16x128xf32>
    %cst = arith.constant dense<0.000000e+00> : vector<16xf32>
    %5 = vector.multi_reduction <add>, %4, %cst [1] : vector<16x128xf32> to vector<16xf32>
    %6 = vector.shape_cast %5 : vector<16xf32> to vector<16x1xf32>
    %cst_4 = arith.constant 1.280000e+02 : f32
    %7 = vector.broadcast %cst_4 : f32 to vector<16x1xf32>
    %8 = arith.divf %6, %7 : vector<16x1xf32>
    %cst_5 = arith.constant 9.99999974E-6 : f32
    %9 = vector.broadcast %cst_5 : f32 to vector<16x1xf32>
    %10 = arith.addf %8, %9 : vector<16x1xf32>
    %11 = math.rsqrt %10 : vector<16x1xf32>
    %12 = vector.broadcast %11 : vector<16x1xf32> to vector<16x128xf32>
    %13 = arith.mulf %1, %12 : vector<16x128xf32>
    %14 = vector.broadcast %3 : vector<1x128xf32> to vector<16x128xf32>
    %15 = arith.mulf %13, %14 : vector<16x128xf32>
    %16 = arith.truncf %15 : vector<16x128xf32> to vector<16x128xbf16>
    %c0_6 = arith.constant 0 : index
    %c0_7 = arith.constant 0 : index
    %17 = vector.load %arg3[%c0_6, %c0_7] : memref<128x640xbf16, #tpu.memory_space<vmem>>, vector<128x640xbf16>
    %cst_8 = arith.constant dense<0.000000e+00> : vector<16x640xf32>
    %18 = tpu.matmul %16, %17, %cst_8 {dimension_numbers = #tpu.dot_dimension_numbers<[1], [0], [0], [1], [0, 0, 1, 1], [], []>} : vector<16x128xbf16>, vector<128x640xbf16>, vector<16x640xf32> -> vector<16x640xf32>
    %19 = vector.extract_strided_slice %18 {offsets = [0, 0], sizes = [16, 128], strides = [1, 1]} : vector<16x640xf32> to vector<16x128xf32>
    %20 = vector.extract_strided_slice %18 {offsets = [0, 128], sizes = [16, 128], strides = [1, 1]} : vector<16x640xf32> to vector<16x128xf32>
    %21 = vector.extract_strided_slice %18 {offsets = [0, 256], sizes = [16, 128], strides = [1, 1]} : vector<16x640xf32> to vector<16x128xf32>
    %22 = vector.extract_strided_slice %18 {offsets = [0, 384], sizes = [16, 128], strides = [1, 1]} : vector<16x640xf32> to vector<16x128xf32>
    %23 = vector.extract_strided_slice %18 {offsets = [0, 512], sizes = [16, 128], strides = [1, 1]} : vector<16x640xf32> to vector<16x128xf32>
    %c0_9 = arith.constant 0 : index
    %c0_10 = arith.constant 0 : index
    %24 = vector.load %arg7[%c0_9, %c0_10] : memref<16x128xf32, #tpu.memory_space<vmem>>, vector<16x128xf32>
    %c0_11 = arith.constant 0 : index
    %c0_12 = arith.constant 0 : index
    %25 = vector.load %arg8[%c0_11, %c0_12] : memref<16x128xf32, #tpu.memory_space<vmem>>, vector<16x128xf32>
    %26 = arith.mulf %19, %24 : vector<16x128xf32>
    %27 = arith.mulf %22, %25 : vector<16x128xf32>
    %28 = arith.addf %26, %27 : vector<16x128xf32>
    %29 = arith.mulf %20, %24 : vector<16x128xf32>
    %30 = arith.mulf %23, %25 : vector<16x128xf32>
    %31 = arith.addf %29, %30 : vector<16x128xf32>
    %c0_13 = arith.constant 0 : index
    %c0_14 = arith.constant 0 : index
    %32 = vector.load %arg9[%c0_13, %c0_14] : memref<64x128xf32, #tpu.memory_space<vmem>>, vector<64x128xf32>
    %33 = vector.shape_cast %28 : vector<16x128xf32> to vector<1x16x128xf32>
    %34 = vector.shape_cast %33 : vector<1x16x128xf32> to vector<1x16x128xf32>
    %35 = vector.broadcast %34 : vector<1x16x128xf32> to vector<4x16x128xf32>
    %36 = vector.shape_cast %35 : vector<4x16x128xf32> to vector<64x128xf32>
    %37 = arith.mulf %36, %32 : vector<64x128xf32>
    %38 = arith.truncf %37 : vector<64x128xf32> to vector<64x128xbf16>
    %39 = arith.truncf %31 : vector<16x128xf32> to vector<16x128xbf16>
    %cst_15 = arith.constant dense<0.000000e+00> : vector<64x16xf32>
    %40 = tpu.matmul %38, %39, %cst_15 {dimension_numbers = #tpu.dot_dimension_numbers<[1], [1], [0], [0], [0, 0, 1, 0], [], []>} : vector<64x128xbf16>, vector<16x128xbf16>, vector<64x16xf32> -> vector<64x16xf32>
    %c0_16 = arith.constant 0 : index
    %c0_17 = arith.constant 0 : index
    %41 = vector.load %arg10[%c0_16, %c0_17] : memref<64x16xf32, #tpu.memory_space<vmem>>, vector<64x16xf32>
    %42 = arith.addf %40, %41 : vector<64x16xf32>
    %cst_18 = arith.constant dense<0xFF800000> : vector<64xf32>
    %43 = vector.multi_reduction <maximumf>, %42, %cst_18 [1] : vector<64x16xf32> to vector<64xf32>
    %44 = vector.shape_cast %43 : vector<64xf32> to vector<64x1xf32>
    %45 = vector.broadcast %44 : vector<64x1xf32> to vector<64x16xf32>
    %46 = arith.subf %42, %45 : vector<64x16xf32>
    %47 = math.exp %46 : vector<64x16xf32>
    %cst_19 = arith.constant dense<0.000000e+00> : vector<64xf32>
    %48 = vector.multi_reduction <add>, %47, %cst_19 [1] : vector<64x16xf32> to vector<64xf32>
    %49 = vector.shape_cast %48 : vector<64xf32> to vector<64x1xf32>
    %50 = tpu.reciprocal %49 {approx = true} : vector<64x1xf32> -> vector<64x1xf32>
    %51 = vector.broadcast %50 : vector<64x1xf32> to vector<64x16xf32>
    %52 = arith.mulf %47, %51 : vector<64x16xf32>
    %53 = arith.truncf %52 : vector<64x16xf32> to vector<64x16xbf16>
    %54 = arith.truncf %21 : vector<16x128xf32> to vector<16x128xbf16>
    %cst_20 = arith.constant dense<0.000000e+00> : vector<64x128xf32>
    %55 = tpu.matmul %53, %54, %cst_20 {dimension_numbers = #tpu.dot_dimension_numbers<[1], [0], [0], [1], [0, 0, 1, 1], [], []>} : vector<64x16xbf16>, vector<16x128xbf16>, vector<64x128xf32> -> vector<64x128xf32>
    %56 = arith.mulf %55, %32 : vector<64x128xf32>
    %57 = vector.extract_strided_slice %56 {offsets = [0, 0], sizes = [16, 128], strides = [1, 1]} : vector<64x128xf32> to vector<16x128xf32>
    %58 = vector.extract_strided_slice %56 {offsets = [16, 0], sizes = [16, 128], strides = [1, 1]} : vector<64x128xf32> to vector<16x128xf32>
    %59 = arith.addf %57, %58 : vector<16x128xf32>
    %60 = vector.extract_strided_slice %56 {offsets = [32, 0], sizes = [16, 128], strides = [1, 1]} : vector<64x128xf32> to vector<16x128xf32>
    %61 = arith.addf %59, %60 : vector<16x128xf32>
    %62 = vector.extract_strided_slice %56 {offsets = [48, 0], sizes = [16, 128], strides = [1, 1]} : vector<64x128xf32> to vector<16x128xf32>
    %63 = arith.addf %61, %62 : vector<16x128xf32>
    %64 = arith.truncf %63 : vector<16x128xf32> to vector<16x128xbf16>
    %c0_21 = arith.constant 0 : index
    %c0_22 = arith.constant 0 : index
    %65 = vector.load %arg4[%c0_21, %c0_22] : memref<128x128xbf16, #tpu.memory_space<vmem>>, vector<128x128xbf16>
    %cst_23 = arith.constant dense<0.000000e+00> : vector<16x128xf32>
    %66 = tpu.matmul %64, %65, %cst_23 {dimension_numbers = #tpu.dot_dimension_numbers<[1], [0], [0], [1], [0, 0, 1, 1], [], []>} : vector<16x128xbf16>, vector<128x128xbf16>, vector<16x128xf32> -> vector<16x128xf32>
    %67 = arith.addf %1, %66 : vector<16x128xf32>
    %68 = vector.extract_strided_slice %2 {offsets = [1, 0], sizes = [1, 128], strides = [1, 1]} : vector<2x128xf32> to vector<1x128xf32>
    %69 = arith.mulf %67, %67 : vector<16x128xf32>
    %cst_24 = arith.constant dense<0.000000e+00> : vector<16xf32>
    %70 = vector.multi_reduction <add>, %69, %cst_24 [1] : vector<16x128xf32> to vector<16xf32>
    %71 = vector.shape_cast %70 : vector<16xf32> to vector<16x1xf32>
    %cst_25 = arith.constant 1.280000e+02 : f32
    %72 = vector.broadcast %cst_25 : f32 to vector<16x1xf32>
    %73 = arith.divf %71, %72 : vector<16x1xf32>
    %cst_26 = arith.constant 9.99999974E-6 : f32
    %74 = vector.broadcast %cst_26 : f32 to vector<16x1xf32>
    %75 = arith.addf %73, %74 : vector<16x1xf32>
    %76 = math.rsqrt %75 : vector<16x1xf32>
    %77 = vector.broadcast %76 : vector<16x1xf32> to vector<16x128xf32>
    %78 = arith.mulf %67, %77 : vector<16x128xf32>
    %79 = vector.broadcast %68 : vector<1x128xf32> to vector<16x128xf32>
    %80 = arith.mulf %78, %79 : vector<16x128xf32>
    %81 = arith.truncf %80 : vector<16x128xf32> to vector<16x128xbf16>
    %c0_27 = arith.constant 0 : index
    %c0_28 = arith.constant 0 : index
    %82 = vector.load %arg5[%c0_27, %c0_28] : memref<128x512xbf16, #tpu.memory_space<vmem>>, vector<128x512xbf16>
    %cst_29 = arith.constant dense<0.000000e+00> : vector<16x512xf32>
    %83 = tpu.matmul %81, %82, %cst_29 {dimension_numbers = #tpu.dot_dimension_numbers<[1], [0], [0], [1], [0, 0, 1, 1], [], []>} : vector<16x128xbf16>, vector<128x512xbf16>, vector<16x512xf32> -> vector<16x512xf32>
    %84 = vector.extract_strided_slice %83 {offsets = [0, 0], sizes = [16, 256], strides = [1, 1]} : vector<16x512xf32> to vector<16x256xf32>
    %85 = vector.extract_strided_slice %83 {offsets = [0, 256], sizes = [16, 256], strides = [1, 1]} : vector<16x512xf32> to vector<16x256xf32>
    %86 = arith.negf %84 : vector<16x256xf32>
    %87 = math.exp %86 : vector<16x256xf32>
    %cst_30 = arith.constant 1.000000e+00 : f32
    %88 = vector.broadcast %cst_30 : f32 to vector<16x256xf32>
    %89 = arith.addf %88, %87 : vector<16x256xf32>
    %90 = arith.divf %88, %89 : vector<16x256xf32>
    %91 = arith.mulf %84, %90 : vector<16x256xf32>
    %92 = arith.mulf %91, %85 : vector<16x256xf32>
    %93 = arith.truncf %92 : vector<16x256xf32> to vector<16x256xbf16>
    %c0_31 = arith.constant 0 : index
    %c0_32 = arith.constant 0 : index
    %94 = vector.load %arg6[%c0_31, %c0_32] : memref<256x128xbf16, #tpu.memory_space<vmem>>, vector<256x128xbf16>
    %cst_33 = arith.constant dense<0.000000e+00> : vector<16x128xf32>
    %95 = tpu.matmul %93, %94, %cst_33 {dimension_numbers = #tpu.dot_dimension_numbers<[1], [0], [0], [1], [0, 0, 1, 1], [], []>} : vector<16x256xbf16>, vector<256x128xbf16>, vector<16x128xf32> -> vector<16x128xf32>
    %96 = arith.addf %67, %95 : vector<16x128xf32>
    %97 = vector.shape_cast %96 : vector<16x128xf32> to vector<2x8x128xf32>
    %c0_34 = arith.constant 0 : index
    %c0_35 = arith.constant 0 : index
    %c0_36 = arith.constant 0 : index
    %98 = vector.load %arg11[%c0_34, %c0_35, %c0_36] : memref<2x8x128xf32, #tpu.memory_space<vmem>>, vector<2x8x128xf32>
    tpu.vector_store %arg11[%c0_34, %c0_35, %c0_36], %97 {strides = array<i32>} : memref<2x8x128xf32, #tpu.memory_space<vmem>>, vector<2x8x128xf32>,
    return
  }
  func.func @transform_0(%arg0: i32) -> (i32, i32, i32) {
    %c0_i32 = arith.constant 0 : i32
    %c0_i32_0 = arith.constant 0 : i32
    %c0_i32_1 = arith.constant 0 : i32
    return %arg0, %c0_i32, %c0_i32_0 : i32, i32, i32
  }
  func.func @transform_1(%arg0: i32) -> (i32, i32) {
    %c0_i32 = arith.constant 0 : i32
    %c0_i32_0 = arith.constant 0 : i32
    %c0_i32_1 = arith.constant 0 : i32
    return %c0_i32, %c0_i32_0 : i32, i32
  }
  func.func @transform_2(%arg0: i32) -> (i32, i32) {
    %c0_i32 = arith.constant 0 : i32
    %c0_i32_0 = arith.constant 0 : i32
    %c0_i32_1 = arith.constant 0 : i32
    return %c0_i32, %c0_i32_0 : i32, i32
  }
  func.func @transform_3(%arg0: i32) -> (i32, i32) {
    %c0_i32 = arith.constant 0 : i32
    %c0_i32_0 = arith.constant 0 : i32
    %c0_i32_1 = arith.constant 0 : i32
    return %c0_i32, %c0_i32_0 : i32, i32
  }
  func.func @transform_4(%arg0: i32) -> (i32, i32) {
    %c0_i32 = arith.constant 0 : i32
    %c0_i32_0 = arith.constant 0 : i32
    %c0_i32_1 = arith.constant 0 : i32
    return %c0_i32, %c0_i32_0 : i32, i32
  }
  func.func @transform_5(%arg0: i32) -> (i32, i32) {
    %c0_i32 = arith.constant 0 : i32
    %c0_i32_0 = arith.constant 0 : i32
    %c0_i32_1 = arith.constant 0 : i32
    return %c0_i32, %c0_i32_0 : i32, i32
  }
  func.func @transform_6(%arg0: i32) -> (i32, i32) {
    %c0_i32 = arith.constant 0 : i32
    %c0_i32_0 = arith.constant 0 : i32
    %c0_i32_1 = arith.constant 0 : i32
    return %c0_i32, %c0_i32_0 : i32, i32
  }
  func.func @transform_7(%arg0: i32) -> (i32, i32) {
    %c0_i32 = arith.constant 0 : i32
    %c0_i32_0 = arith.constant 0 : i32
    %c0_i32_1 = arith.constant 0 : i32
    return %c0_i32, %c0_i32_0 : i32, i32
  }
  func.func @transform_8(%arg0: i32) -> (i32, i32) {
    %c0_i32 = arith.constant 0 : i32
    %c0_i32_0 = arith.constant 0 : i32
    %c0_i32_1 = arith.constant 0 : i32
    return %c0_i32, %c0_i32_0 : i32, i32
  }
  func.func @transform_9(%arg0: i32) -> (i32, i32) {
    %c0_i32 = arith.constant 0 : i32
    %c0_i32_0 = arith.constant 0 : i32
    %c0_i32_1 = arith.constant 0 : i32
    return %c0_i32, %c0_i32_0 : i32, i32
  }
  func.func @transform_10(%arg0: i32) -> (i32, i32, i32) {
    %c0_i32 = arith.constant 0 : i32
    %c0_i32_0 = arith.constant 0 : i32
    %c0_i32_1 = arith.constant 0 : i32
    return %arg0, %c0_i32, %c0_i32_0 : i32, i32, i32
  }
}

</mosaic_0001>

<llo_original>
// kernel: transformer_block.1
$region0: #{transformer_block.1}
  #allocation0 [shape = 'u32[]', space=smem, size = 0x4, offset = 0x4, fixed_abs, tag = 'smem constant byte address 0x4 - core index']
  #allocation1 [shape = 'u32[144,128]{1,0:T(1,128)}', space=vmem, size = 0x12000, scoped, tag = 'internal scratch']
  %s0 = inlined_call_operand.hbm [shape: f32[2,8,128], index: 0, kind: input, shape index: {}, may-alias: {0,10}]
  %s1 = inlined_call_operand.vmem [shape: f32[2,128], index: 1, kind: input, shape index: {}]
  %s2 = inlined_call_operand.hbm [shape: bf16[128,640], index: 2, kind: input, shape index: {}]
  %s3 = inlined_call_operand.vmem [shape: bf16[128,128], index: 3, kind: input, shape index: {}]
  %s4 = inlined_call_operand.hbm [shape: bf16[128,512], index: 4, kind: input, shape index: {}]
  %s5 = inlined_call_operand.hbm [shape: bf16[256,128], index: 5, kind: input, shape index: {}]
  %s6 = inlined_call_operand.vmem [shape: f32[16,128], index: 6, kind: input, shape index: {}]
  %s7 = inlined_call_operand.vmem [shape: f32[16,128], index: 7, kind: input, shape index: {}]
  %s8 = inlined_call_operand.hbm [shape: f32[64,128], index: 8, kind: input, shape index: {}]
  %s9 = inlined_call_operand.vmem [shape: f32[64,16], index: 9, kind: input, shape index: {}]
  %s10 = inlined_call_operand.hbm [shape: f32[2,8,128], index: 10, kind: output, shape index: {}, may-alias: {0,10}]
  %s11 = sld [smem:[#allocation0]]
  $region70: #{transformer_block.1} parent=0
    _
  %s13 = ssub.s32 1, %s11
  %s14 = scalar_select 0, %s13, %s11
  $region1: #{transformer_block.1} parent=0
    #allocation2 [shape = 'u8[8192]{0}', space=vmem, size = 0x2000, scoped, tag = 'input window, operand 0, single buffered']
    #allocation3 [shape = 's32[1]{0}', space=sflag, size = 0x4, scoped, tag = 'scoped memory for transformer_block.1']
    #allocation4 [shape = 's32[1]{0}', space=sflag, size = 0x4, scoped, tag = 'scoped memory for transformer_block.1']
    #allocation5 [shape = 'u8[163840]{0}', space=vmem, size = 0x28000, scoped, tag = 'input window, operand 2, single buffered']
    #allocation6 [shape = 's32[1]{0}', space=sflag, size = 0x4, scoped, tag = 'scoped memory for transformer_block.1']
    #allocation7 [shape = 'u8[131072]{0}', space=vmem, size = 0x20000, scoped, tag = 'input window, operand 4, single buffered']
    #allocation8 [shape = 'u8[65536]{0}', space=vmem, size = 0x10000, scoped, tag = 'input window, operand 5, single buffered']
    #allocation9 [shape = 's32[1]{0}', space=sflag, size = 0x4, scoped, tag = 'scoped memory for transformer_block.1']
    #allocation10 [shape = 'u8[32768]{0}', space=vmem, size = 0x8000, scoped, tag = 'input window, operand 8, single buffered']
    #allocation11 [shape = 'u8[8192]{0}', space=vmem, size = 0x2000, scoped, tag = 'output window, operand 0, single buffered']
    %15 = vsyncpa [#allocation3], 0
    %16 = vsyncpa [#allocation6], 0
    %17 = vsyncpa [#allocation9], 0
    %18 = vsyncpa [#allocation4], 0
    // Predicated region
    $region2: #{transformer_block.1} parent=1 // pred_check
      _
    $region3: #{transformer_block.1} parent=1 // pred_check_branch
      %20 = sbr.rel (0) target = $region5
    $region4: #{transformer_block.1} parent=1 // pred_region
      %s22 = ssub.s32 256, 256
      %23 = vsyncadd [#allocation3], %s22
      %s24 = sshll.u32 [#allocation2], 4
      %s25 = int_to_ptr.vmem [resolvable:$true] %s24
      %30 = dma.hbm_to_vmem [thread:$0]  %s0, 256, %s25, [#allocation3], 128, 128, 8
    $region5: #{transformer_block.1} parent=1 // pred_fallthru
      _
    // Predicated region
    $region6: #{transformer_block.1} parent=1 // pred_check
      _
    $region7: #{transformer_block.1} parent=1 // pred_check_branch
      %32 = sbr.rel (0) target = $region9
    $region8: #{transformer_block.1} parent=1 // pred_region
      _
    $region9: #{transformer_block.1} parent=1 // pred_fallthru
      _
    // Predicated region
    $region10: #{transformer_block.1} parent=1 // pred_check
      _
    $region11: #{transformer_block.1} parent=1 // pred_check_branch
      %34 = sbr.rel (0) target = $region13
    $region12: #{transformer_block.1} parent=1 // pred_region
      %s36 = ssub.s32 5120, 5120
      %37 = vsyncadd [#allocation6], %s36
      %s38 = sshll.u32 [#allocation5], 4
      %s39 = int_to_ptr.vmem [resolvable:$true] %s38
      %44 = dma.hbm_to_vmem [thread:$0]  %s2, 5120, %s39, [#allocation6], 320, 320, 20
    $region13: #{transformer_block.1} parent=1 // pred_fallthru
      _
    // Predicated region
    $region14: #{transformer_block.1} parent=1 // pred_check
      _
    $region15: #{transformer_block.1} parent=1 // pred_check_branch
      %46 = sbr.rel (0) target = $region17
    $region16: #{transformer_block.1} parent=1 // pred_region
      _
    $region17: #{transformer_block.1} parent=1 // pred_fallthru
      _
    // Predicated region
    $region18: #{transformer_block.1} parent=1 // pred_check
      _
    $region19: #{transformer_block.1} parent=1 // pred_check_branch
      %48 = sbr.rel (0) target = $region21
    $region20: #{transformer_block.1} parent=1 // pred_region
      %s50 = ssub.s32 4096, 4096
      %51 = vsyncadd [#allocation6], %s50
      %s52 = sshll.u32 [#allocation7], 4
      %s53 = int_to_ptr.vmem [resolvable:$true] %s52
      %58 = dma.hbm_to_vmem [thread:$0]  %s4, 4096, %s53, [#allocation6], 256, 256, 16
    $region21: #{transformer_block.1} parent=1 // pred_fallthru
      _
    // Predicated region
    $region22: #{transformer_block.1} parent=1 // pred_check
      _
    $region23: #{transformer_block.1} parent=1 // pred_check_branch
      %60 = sbr.rel (0) target = $region25
    $region24: #{transformer_block.1} parent=1 // pred_region
      %s62 = ssub.s32 2048, 2048
      %63 = vsyncadd [#allocation9], %s62
      %s64 = sshll.u32 [#allocation8], 4
      %s65 = int_to_ptr.vmem [resolvable:$true] %s64
      %70 = dma.hbm_to_vmem [thread:$0]  %s5, 2048, %s65, [#allocation9], 64, 64, 4
    $region25: #{transformer_block.1} parent=1 // pred_fallthru
      _
    // Predicated region
    $region26: #{transformer_block.1} parent=1 // pred_check
      _
    $region27: #{transformer_block.1} parent=1 // pred_check_branch
      %72 = sbr.rel (0) target = $region29
    $region28: #{transformer_block.1} parent=1 // pred_region
      _
    $region29: #{transformer_block.1} parent=1 // pred_fallthru
      _
    // Predicated region
    $region30: #{transformer_block.1} parent=1 // pred_check
      _
    $region31: #{transformer_block.1} parent=1 // pred_check_branch
      %74 = sbr.rel (0) target = $region33
    $region32: #{transformer_block.1} parent=1 // pred_region
      _
    $region33: #{transformer_block.1} parent=1 // pred_fallthru
      _
    // Predicated region
    $region34: #{transformer_block.1} parent=1 // pred_check
      _
    $region35: #{transformer_block.1} parent=1 // pred_check_branch
      %76 = sbr.rel (0) target = $region37
    $region36: #{transformer_block.1} parent=1 // pred_region
      %s78 = ssub.s32 1024, 1024
      %79 = vsyncadd [#allocation9], %s78
      %s80 = sshll.u32 [#allocation10], 4
      %s81 = int_to_ptr.vmem [resolvable:$true] %s80
      %86 = dma.hbm_to_vmem [thread:$0]  %s8, 1024, %s81, [#allocation9], 128, 128, 8
    $region37: #{transformer_block.1} parent=1 // pred_fallthru
      _
    // Predicated region
    $region38: #{transformer_block.1} parent=1 // pred_check
      _
    $region39: #{transformer_block.1} parent=1 // pred_check_branch
      %88 = sbr.rel (0) target = $region41
    $region40: #{transformer_block.1} parent=1 // pred_region
      _
    $region41: #{transformer_block.1} parent=1 // pred_fallthru
      _
    // Predicated region
    $region42: #{transformer_block.1} parent=1 // pred_check
      _
    $region43: #{transformer_block.1} parent=1 // pred_check_branch
      %90 = sbr.rel (0) target = $region45
    $region44: #{transformer_block.1} parent=1 // pred_region
      %91 = dma.done [#allocation3], 256
    $region45: #{transformer_block.1} parent=1 // pred_fallthru
      _
    // Predicated region
    $region46: #{transformer_block.1} parent=1 // pred_check
      _
    $region47: #{transformer_block.1} parent=1 // pred_check_branch
      %93 = sbr.rel (0) target = $region49
    $region48: #{transformer_block.1} parent=1 // pred_region
      %94 = dma.done [#allocation6], 5120
    $region49: #{transformer_block.1} parent=1 // pred_fallthru
      _
    // Predicated region
    $region50: #{transformer_block.1} parent=1 // pred_check
      _
    $region51: #{transformer_block.1} parent=1 // pred_check_branch
      %96 = sbr.rel (0) target = $region53
    $region52: #{transformer_block.1} parent=1 // pred_region
      %97 = dma.done [#allocation6], 4096
    $region53: #{transformer_block.1} parent=1 // pred_fallthru
      _
    // Predicated region
    $region54: #{transformer_block.1} parent=1 // pred_check
      _
    $region55: #{transformer_block.1} parent=1 // pred_check_branch
      %99 = sbr.rel (0) target = $region57
    $region56: #{transformer_block.1} parent=1 // pred_region
      %100 = dma.done [#allocation9], 2048
    $region57: #{transformer_block.1} parent=1 // pred_fallthru
      _
    // Predicated region
    $region58: #{transformer_block.1} parent=1 // pred_check
      _
    $region59: #{transformer_block.1} parent=1 // pred_check_branch
      %102 = sbr.rel (0) target = $region61
    $region60: #{transformer_block.1} parent=1 // pred_region
      %103 = dma.done [#allocation9], 1024
    $region61: #{transformer_block.1} parent=1 // pred_fallthru
      _
    %v105 = vld [vmem:[#allocation2] sm:$0xff]
    %v106 = vld [vmem:[#allocation2 + $0x8] sm:$0xff]
    %v107 = vld [vmem:[%s1] sm:$0x3]
    %v108 = vmul.f32 %v105, %v105
    %v109 = vmul.f32 %v106, %v106
    %110 = vadd.xlane.f32.xlu0 %v108
    %v111 = vpop.xlane.xlu0 %110
    %112 = vadd.xlane.f32.xlu0 %v109
    %v113 = vpop.xlane.xlu0 %112
    %v114 = vrcp.pop 128.0
    %v115 = vmul.f32 %v111, %v114
    %v116 = vmul.f32 %v113, %v114
    %v117 = vadd.f32 %v115, 1e-05
    %v118 = vadd.f32 %v116, 1e-05
    %v119 = vrsqrt.pop %v117
    %v120 = vrsqrt.pop %v118
    %v121 = vmul.f32 %v105, %v119
    %v122 = vmul.f32 %v106, %v120
    %v123 = vlaneseq
    %v124 = vshrl.u32 %v123, 7
    %v125 = vsub.s32 0, %v124
    %v126 = vrot.slane %v107, %v125
    %v127 = vmul.f32 %v121, %v126
    %v128 = vmul.f32 %v122, %v126
    %v129 = vpack.c.bf16 %v128, %v127
    %v130 = vld [vmem:[#allocation5] sm:$0xff]
    %v131 = vld [vmem:[#allocation5 + $0x8] sm:$0xff]
    %v132 = vld [vmem:[#allocation5 + $0x10] sm:$0xf]
    %v133 = vld [vmem:[#allocation5 + $0x14] sm:$0xff]
    %v134 = vld [vmem:[#allocation5 + $0x1c] sm:$0xff]
    %v135 = vld [vmem:[#allocation5 + $0x24] sm:$0xf]
    %v136 = vld [vmem:[#allocation5 + $0x28] sm:$0xff]
    %v137 = vld [vmem:[#allocation5 + $0x30] sm:$0xff]
    %v138 = vld [vmem:[#allocation5 + $0x38] sm:$0xf]
    %v139 = vld [vmem:[#allocation5 + $0x3c] sm:$0xff]
    %v140 = vld [vmem:[#allocation5 + $0x44] sm:$0xff]
    %v141 = vld [vmem:[#allocation5 + $0x4c] sm:$0xf]
    %v142 = vld [vmem:[#allocation5 + $0x50] sm:$0xff]
    %v143 = vld [vmem:[#allocation5 + $0x58] sm:$0xff]
    %v144 = vld [vmem:[#allocation5 + $0x60] sm:$0xf]
    %v145 = vld [vmem:[#allocation5 + $0x64] sm:$0xff]
    %v146 = vld [vmem:[#allocation5 + $0x6c] sm:$0xff]
    %v147 = vld [vmem:[#allocation5 + $0x74] sm:$0xf]
    %v148 = vld [vmem:[#allocation5 + $0x78] sm:$0xff]
    %v149 = vld [vmem:[#allocation5 + $0x80] sm:$0xff]
    %v150 = vld [vmem:[#allocation5 + $0x88] sm:$0xf]
    %v151 = vld [vmem:[#allocation5 + $0x8c] sm:$0xff]
    %v152 = vld [vmem:[#allocation5 + $0x94] sm:$0xff]
    %v153 = vld [vmem:[#allocation5 + $0x9c] sm:$0xf]
    %v154 = vld [vmem:[#allocation5 + $0xa0] sm:$0xff]
    %v155 = vld [vmem:[#allocation5 + $0xa8] sm:$0xff]
    %v156 = vld [vmem:[#allocation5 + $0xb0] sm:$0xf]
    %v157 = vld [vmem:[#allocation5 + $0xb4] sm:$0xff]
    %v158 = vld [vmem:[#allocation5 + $0xbc] sm:$0xff]
    %v159 = vld [vmem:[#allocation5 + $0xc4] sm:$0xf]
    %v160 = vld [vmem:[#allocation5 + $0xc8] sm:$0xff]
    %v161 = vld [vmem:[#allocation5 + $0xd0] sm:$0xff]
    %v162 = vld [vmem:[#allocation5 + $0xd8] sm:$0xf]
    %v163 = vld [vmem:[#allocation5 + $0xdc] sm:$0xff]
    %v164 = vld [vmem:[#allocation5 + $0xe4] sm:$0xff]
    %v165 = vld [vmem:[#allocation5 + $0xec] sm:$0xf]
    %v166 = vld [vmem:[#allocation5 + $0xf0] sm:$0xff]
    %v167 = vld [vmem:[#allocation5 + $0xf8] sm:$0xff]
    %v168 = vld [vmem:[#allocation5 + $0x100] sm:$0xf]
    %v169 = vld [vmem:[#allocation5 + $0x104] sm:$0xff]
    %v170 = vld [vmem:[#allocation5 + $0x10c] sm:$0xff]
    %v171 = vld [vmem:[#allocation5 + $0x114] sm:$0xf]
    %v172 = vld [vmem:[#allocation5 + $0x118] sm:$0xff]
    %v173 = vld [vmem:[#allocation5 + $0x120] sm:$0xff]
    %v174 = vld [vmem:[#allocation5 + $0x128] sm:$0xf]
    %v175 = vld [vmem:[#allocation5 + $0x12c] sm:$0xff]
    %v176 = vld [vmem:[#allocation5 + $0x134] sm:$0xff]
    %v177 = vld [vmem:[#allocation5 + $0x13c] sm:$0xf]
    %v226 = vunpack.c.l.b16 %v130
    %v227 = vunpack.c.h.b16 %v130
    %v228 = vunpack.c.l.b16 %v131
    %v229 = vunpack.c.h.b16 %v131
    %v230 = vunpack.c.l.b16 %v132
    %v231 = vunpack.c.l.b16 %v133
    %v232 = vunpack.c.h.b16 %v133
    %v233 = vunpack.c.l.b16 %v134
    %v234 = vunpack.c.h.b16 %v134
    %v235 = vunpack.c.l.b16 %v135
    %v236 = vunpack.c.l.b16 %v136
    %v237 = vunpack.c.h.b16 %v136
    %v238 = vunpack.c.l.b16 %v137
    %v239 = vunpack.c.h.b16 %v137
    %v240 = vunpack.c.l.b16 %v138
    %v241 = vunpack.c.l.b16 %v139
    %v242 = vunpack.c.h.b16 %v139
    %v243 = vunpack.c.l.b16 %v140
    %v244 = vunpack.c.h.b16 %v140
    %v245 = vunpack.c.l.b16 %v141
    %v246 = vunpack.c.l.b16 %v142
    %v247 = vunpack.c.h.b16 %v142
    %v248 = vunpack.c.l.b16 %v143
    %v249 = vunpack.c.h.b16 %v143
    %v250 = vunpack.c.l.b16 %v144
    %v251 = vunpack.c.l.b16 %v145
    %v252 = vunpack.c.h.b16 %v145
    %v253 = vunpack.c.l.b16 %v146
    %v254 = vunpack.c.h.b16 %v146
    %v255 = vunpack.c.l.b16 %v147
    %v256 = vunpack.c.l.b16 %v148
    %v257 = vunpack.c.h.b16 %v148
    %v258 = vunpack.c.l.b16 %v149
    %v259 = vunpack.c.h.b16 %v149
    %v260 = vunpack.c.l.b16 %v150
    %v261 = vunpack.c.l.b16 %v151
    %v262 = vunpack.c.h.b16 %v151
    %v263 = vunpack.c.l.b16 %v152
    %v264 = vunpack.c.h.b16 %v152
    %v265 = vunpack.c.l.b16 %v153
    %v266 = vunpack.c.l.b16 %v154
    %v267 = vunpack.c.h.b16 %v154
    %v268 = vunpack.c.l.b16 %v155
    %v269 = vunpack.c.h.b16 %v155
    %v270 = vunpack.c.l.b16 %v156
    %v271 = vunpack.c.l.b16 %v157
    %v272 = vunpack.c.h.b16 %v157
    %v273 = vunpack.c.l.b16 %v158
    %v274 = vunpack.c.h.b16 %v158
    %v275 = vunpack.c.l.b16 %v159
    %v276 = vunpack.c.l.b16 %v160
    %v277 = vunpack.c.h.b16 %v160
    %v278 = vunpack.c.l.b16 %v161
    %v279 = vunpack.c.h.b16 %v161
    %v280 = vunpack.c.l.b16 %v162
    %v281 = vunpack.c.l.b16 %v163
    %v282 = vunpack.c.h.b16 %v163
    %v283 = vunpack.c.l.b16 %v164
    %v284 = vunpack.c.h.b16 %v164
    %v285 = vunpack.c.l.b16 %v165
    %v286 = vunpack.c.l.b16 %v166
    %v287 = vunpack.c.h.b16 %v166
    %v288 = vunpack.c.l.b16 %v167
    %v289 = vunpack.c.h.b16 %v167
    %v290 = vunpack.c.l.b16 %v168
    %v291 = vunpack.c.l.b16 %v169
    %v292 = vunpack.c.h.b16 %v169
    %v293 = vunpack.c.l.b16 %v170
    %v294 = vunpack.c.h.b16 %v170
    %v295 = vunpack.c.l.b16 %v171
    %v296 = vunpack.c.l.b16 %v172
    %v297 = vunpack.c.h.b16 %v172
    %v298 = vunpack.c.l.b16 %v173
    %v299 = vunpack.c.h.b16 %v173
    %v300 = vunpack.c.l.b16 %v174
    %v301 = vunpack.c.l.b16 %v175
    %v302 = vunpack.c.h.b16 %v175
    %v303 = vunpack.c.l.b16 %v176
    %v304 = vunpack.c.h.b16 %v176
    %v305 = vunpack.c.l.b16 %v177
    %v306 = vpack.c.b16 %v231, %v226
    %v307 = vpack.c.b16 %v232, %v227
    %v308 = vpack.c.b16 %v233, %v228
    %v309 = vpack.c.b16 %v234, %v229
    %v310 = vpack.c.b16 %v235, %v230
    %v311 = vpack.c.b16 %v241, %v236
    %v312 = vpack.c.b16 %v242, %v237
    %v313 = vpack.c.b16 %v243, %v238
    %v314 = vpack.c.b16 %v244, %v239
    %v315 = vpack.c.b16 %v245, %v240
    %v316 = vpack.c.b16 %v251, %v246
    %v317 = vpack.c.b16 %v252, %v247
    %v318 = vpack.c.b16 %v253, %v248
    %v319 = vpack.c.b16 %v254, %v249
    %v320 = vpack.c.b16 %v255, %v250
    %v321 = vpack.c.b16 %v261, %v256
    %v322 = vpack.c.b16 %v262, %v257
    %v323 = vpack.c.b16 %v263, %v258
    %v324 = vpack.c.b16 %v264, %v259
    %v325 = vpack.c.b16 %v265, %v260
    %v326 = vpack.c.b16 %v271, %v266
    %v327 = vpack.c.b16 %v272, %v267
    %v328 = vpack.c.b16 %v273, %v268
    %v329 = vpack.c.b16 %v274, %v269
    %v330 = vpack.c.b16 %v275, %v270
    %v331 = vpack.c.b16 %v281, %v276
    %v332 = vpack.c.b16 %v282, %v277
    %v333 = vpack.c.b16 %v283, %v278
    %v334 = vpack.c.b16 %v284, %v279
    %v335 = vpack.c.b16 %v285, %v280
    %v336 = vpack.c.b16 %v291, %v286
    %v337 = vpack.c.b16 %v292, %v287
    %v338 = vpack.c.b16 %v293, %v288
    %v339 = vpack.c.b16 %v294, %v289
    %v340 = vpack.c.b16 %v295, %v290
    %v341 = vpack.c.b16 %v301, %v296
    %v342 = vpack.c.b16 %v302, %v297
    %v343 = vpack.c.b16 %v303, %v298
    %v344 = vpack.c.b16 %v304, %v299
    %v345 = vpack.c.b16 %v305, %v300
    %386 = vmatprep.subr.bf16.mxu0 %v342
    %387 = vmatpush1.bf16.msra.mxu0 %v341
    %388 = vmatprep.subr.bf16.mxu0 %v337
    %389 = vmatpush1.bf16.msra.mxu0 %v336
    %390 = vmatprep.subr.bf16.mxu0 %v332
    %391 = vmatpush1.bf16.msra.mxu0 %v331
    %392 = vmatprep.subr.bf16.mxu0 %v327
    %393 = vmatpush1.bf16.msra.mxu0 %v326
    %394 = vmatprep.subr.bf16.mxu0 %v322
    %395 = vmatpush1.bf16.msra.mxu0 %v321
    %396 = vmatprep.subr.bf16.mxu0 %v317
    %397 = vmatpush1.bf16.msra.mxu0 %v316
    %398 = vmatprep.subr.bf16.mxu0 %v312
    %399 = vmatpush1.bf16.msra.mxu0 %v311
    %400 = vmatprep.subr.bf16.mxu0 %v307
    %401 = vmatpush1.bf16.msra.mxu0 %v306
    %402 = vmatprep.subr.bf16.mxu0 0
    %403 = vmatpush2.bf16.msra.mxu0 0
    %404 = vmatprep.subr.bf16.mxu0 0
    %405 = vmatpush2.bf16.msra.mxu0 0
    %406 = vmatprep.subr.bf16.mxu0 0
    %407 = vmatpush2.bf16.msra.mxu0 0
    %408 = vmatprep.subr.bf16.mxu0 0
    %409 = vmatpush2.bf16.msra.mxu0 0
    %410 = vmatprep.subr.bf16.mxu0 0
    %411 = vmatpush2.bf16.msra.mxu0 0
    %412 = vmatprep.subr.bf16.mxu0 0
    %413 = vmatpush2.bf16.msra.mxu0 0
    %414 = vmatprep.subr.bf16.mxu0 0
    %415 = vmatpush2.bf16.msra.mxu0 0
    %416 = vmatprep.subr.bf16.mxu0 0
    %417 = vmatpush2.bf16.msra.mxu0 0
    %418 = vmatprep.mubr.bf16.mxu0 0
    %419 = vmatmul.mubr.bf16.gmra.mxu0 %v129
    %v420 = vpop.f32.mrf.mxu0
    %v421 = vadd.f32 0.0, %v420
    %v422 = vpop.f32.mrf.mxu0
    %v423 = vadd.f32 0.0, %v422
    %v424 = vpop.f32.mrf.mxu0
    %v425 = vadd.f32 0.0, %v424
    %v426 = vpop.f32.mrf.mxu0
    %v427 = vadd.f32 0.0, %v426
    %428 = vdwg.mxu0
    %429 = vmatprep.subr.bf16.mxu0 %v344
    %430 = vmatpush1.bf16.msra.mxu0 %v343
    %431 = vmatprep.subr.bf16.mxu0 %v339
    %432 = vmatpush1.bf16.msra.mxu0 %v338
    %433 = vmatprep.subr.bf16.mxu0 %v334
    %434 = vmatpush1.bf16.msra.mxu0 %v333
    %435 = vmatprep.subr.bf16.mxu0 %v329
    %436 = vmatpush1.bf16.msra.mxu0 %v328
    %437 = vmatprep.subr.bf16.mxu0 %v324
    %438 = vmatpush1.bf16.msra.mxu0 %v323
    %439 = vmatprep.subr.bf16.mxu0 %v319
    %440 = vmatpush1.bf16.msra.mxu0 %v318
    %441 = vmatprep.subr.bf16.mxu0 %v314
    %442 = vmatpush1.bf16.msra.mxu0 %v313
    %443 = vmatprep.subr.bf16.mxu0 %v309
    %444 = vmatpush1.bf16.msra.mxu0 %v308
    %445 = vmatprep.subr.bf16.mxu0 0
    %446 = vmatpush2.bf16.msra.mxu0 0
    %447 = vmatprep.subr.bf16.mxu0 0
    %448 = vmatpush2.bf16.msra.mxu0 0
    %449 = vmatprep.subr.bf16.mxu0 0
    %450 = vmatpush2.bf16.msra.mxu0 0
    %451 = vmatprep.subr.bf16.mxu0 0
    %452 = vmatpush2.bf16.msra.mxu0 0
    %453 = vmatprep.subr.bf16.mxu0 0
    %454 = vmatpush2.bf16.msra.mxu0 0
    %455 = vmatprep.subr.bf16.mxu0 0
    %456 = vmatpush2.bf16.msra.mxu0 0
    %457 = vmatprep.subr.bf16.mxu0 0
    %458 = vmatpush2.bf16.msra.mxu0 0
    %459 = vmatprep.subr.bf16.mxu0 0
    %460 = vmatpush2.bf16.msra.mxu0 0
    %461 = vmatprep.mubr.bf16.mxu0 0
    %462 = vmatmul.mubr.bf16.gmra.mxu0 %v129
    %v463 = vpop.f32.mrf.mxu0
    %v464 = vadd.f32 0.0, %v463
    %v465 = vpop.f32.mrf.mxu0
    %v466 = vadd.f32 0.0, %v465
    %v467 = vpop.f32.mrf.mxu0
    %v468 = vadd.f32 0.0, %v467
    %v469 = vpop.f32.mrf.mxu0
    %v470 = vadd.f32 0.0, %v469
    %471 = vdwg.mxu0
    %472 = vmatprep.subr.bf16.mxu0 0
    %473 = vmatpush1.bf16.msra.mxu0 %v345
    %474 = vmatprep.subr.bf16.mxu0 0
    %475 = vmatpush1.bf16.msra.mxu0 %v340
    %476 = vmatprep.subr.bf16.mxu0 0
    %477 = vmatpush1.bf16.msra.mxu0 %v335
    %478 = vmatprep.subr.bf16.mxu0 0
    %479 = vmatpush1.bf16.msra.mxu0 %v330
    %480 = vmatprep.subr.bf16.mxu0 0
    %481 = vmatpush1.bf16.msra.mxu0 %v325
    %482 = vmatprep.subr.bf16.mxu0 0
    %483 = vmatpush1.bf16.msra.mxu0 %v320
    %484 = vmatprep.subr.bf16.mxu0 0
    %485 = vmatpush1.bf16.msra.mxu0 %v315
    %486 = vmatprep.subr.bf16.mxu0 0
    %487 = vmatpush1.bf16.msra.mxu0 %v310
    %488 = vmatprep.subr.bf16.mxu0 0
    %489 = vmatpush2.bf16.msra.mxu0 0
    %490 = vmatprep.subr.bf16.mxu0 0
    %491 = vmatpush2.bf16.msra.mxu0 0
    %492 = vmatprep.subr.bf16.mxu0 0
    %493 = vmatpush2.bf16.msra.mxu0 0
    %494 = vmatprep.subr.bf16.mxu0 0
    %495 = vmatpush2.bf16.msra.mxu0 0
    %496 = vmatprep.subr.bf16.mxu0 0
    %497 = vmatpush2.bf16.msra.mxu0 0
    %498 = vmatprep.subr.bf16.mxu0 0
    %499 = vmatpush2.bf16.msra.mxu0 0
    %500 = vmatprep.subr.bf16.mxu0 0
    %501 = vmatpush2.bf16.msra.mxu0 0
    %502 = vmatprep.subr.bf16.mxu0 0
    %503 = vmatpush2.bf16.msra.mxu0 0
    %504 = vmatprep.mubr.bf16.mxu0 0
    %505 = vmatmul.mubr.bf16.gmra.mxu0 %v129
    %v506 = vpop.f32.mrf.mxu0
    %v507 = vadd.f32 0.0, %v506
    %v508 = vpop.f32.mrf.mxu0
    %v509 = vpop.f32.mrf.mxu0
    %v510 = vadd.f32 0.0, %v509
    %v511 = vpop.f32.mrf.mxu0
    %512 = vdwg.mxu0
    %v513 = vld [vmem:[%s6] sm:$0xff]
    %v514 = vld [vmem:[%s6 + $0x8] sm:$0xff]
    %v515 = vld [vmem:[%s7] sm:$0xff]
    %v516 = vld [vmem:[%s7 + $0x8] sm:$0xff]
    %v517 = vmul.f32 %v421, %v513
    %v518 = vmul.f32 %v425, %v514
    %v519 = vmul.f32 %v466, %v515
    %v520 = vmul.f32 %v470, %v516
    %v521 = vadd.f32 %v517, %v519
    %v522 = vadd.f32 %v518, %v520
    %v523 = vmul.f32 %v423, %v513
    %v524 = vmul.f32 %v427, %v514
    %v525 = vmul.f32 %v507, %v515
    %v526 = vmul.f32 %v510, %v516
    %v527 = vadd.f32 %v523, %v525
    %v528 = vadd.f32 %v524, %v526
    %v529 = vld [vmem:[#allocation10] sm:$0xff]
    %v530 = vld [vmem:[#allocation10 + $0x8] sm:$0xff]
    %v531 = vld [vmem:[#allocation10 + $0x10] sm:$0xff]
    %v532 = vld [vmem:[#allocation10 + $0x18] sm:$0xff]
    %v533 = vld [vmem:[#allocation10 + $0x20] sm:$0xff]
    %v534 = vld [vmem:[#allocation10 + $0x28] sm:$0xff]
    %v535 = vld [vmem:[#allocation10 + $0x30] sm:$0xff]
    %v536 = vld [vmem:[#allocation10 + $0x38] sm:$0xff]
    %v537 = vmul.f32 %v521, %v529
    %v538 = vmul.f32 %v522, %v530
    %v539 = vmul.f32 %v521, %v531
    %v540 = vmul.f32 %v522, %v532
    %v541 = vmul.f32 %v521, %v533
    %v542 = vmul.f32 %v522, %v534
    %v543 = vmul.f32 %v521, %v535
    %v544 = vmul.f32 %v522, %v536
    %v545 = vpack.c.bf16 %v538, %v537
    %v546 = vpack.c.bf16 %v540, %v539
    %v547 = vpack.c.bf16 %v542, %v541
    %v548 = vpack.c.bf16 %v544, %v543
    %v549 = vpack.c.bf16 %v528, %v527
    %v550 = vld [vmem:[%s9] sm:$0xff]
    %v551 = vld [vmem:[%s9 + $0x8] sm:$0xff]
    %v552 = vld [vmem:[%s9 + $0x10] sm:$0xff]
    %v553 = vld [vmem:[%s9 + $0x18] sm:$0xff]
    %v554 = vld [vmem:[%s9 + $0x20] sm:$0xff]
    %v555 = vld [vmem:[%s9 + $0x28] sm:$0xff]
    %v556 = vld [vmem:[%s9 + $0x30] sm:$0xff]
    %v557 = vld [vmem:[%s9 + $0x38] sm:$0xff]
    %558 = vmatprep.subr.bf16.mxu0 0
    %559 = vmatpush1.bf16.xpose.msra.mxu0 0
    %560 = vmatprep.subr.bf16.mxu0 0
    %561 = vmatpush1.bf16.xpose.msra.mxu0 0
    %562 = vmatprep.subr.bf16.mxu0 0
    %563 = vmatpush1.bf16.xpose.msra.mxu0 0
    %564 = vmatprep.subr.bf16.mxu0 0
    %565 = vmatpush1.bf16.xpose.msra.mxu0 0
    %566 = vmatprep.subr.bf16.mxu0 0
    %567 = vmatpush1.bf16.xpose.msra.mxu0 0
    %568 = vmatprep.subr.bf16.mxu0 0
    %569 = vmatpush1.bf16.xpose.msra.mxu0 0
    %570 = vmatprep.subr.bf16.mxu0 0
    %571 = vmatpush1.bf16.xpose.msra.mxu0 0
    %572 = vmatprep.subr.bf16.mxu0 0
    %573 = vmatpush1.bf16.xpose.msra.mxu0 %v549
    %574 = vmatprep.subr.bf16.mxu0 0
    %575 = vmatpush2.bf16.xpose.msra.mxu0 0
    %576 = vmatprep.subr.bf16.mxu0 0
    %577 = vmatpush2.bf16.xpose.msra.mxu0 0
    %578 = vmatprep.subr.bf16.mxu0 0
    %579 = vmatpush2.bf16.xpose.msra.mxu0 0
    %580 = vmatprep.subr.bf16.mxu0 0
    %581 = vmatpush2.bf16.xpose.msra.mxu0 0
    %582 = vmatprep.subr.bf16.mxu0 0
    %583 = vmatpush2.bf16.xpose.msra.mxu0 0
    %584 = vmatprep.subr.bf16.mxu0 0
    %585 = vmatpush2.bf16.xpose.msra.mxu0 0
    %586 = vmatprep.subr.bf16.mxu0 0
    %587 = vmatpush2.bf16.xpose.msra.mxu0 0
    %588 = vmatprep.subr.bf16.mxu0 0
    %589 = vmatpush2.bf16.xpose.msra.mxu0 0
    %590 = vmatprep.mubr.bf16.mxu0 0
    %591 = vmatmul.mubr.bf16.gmra.mxu0 %v545
    %v592 = vpop.f32.mrf.mxu0
    %v593 = vadd.f32 %v550, %v592
    %v594 = vpop.f32.mrf.mxu0
    %v595 = vpop.f32.mrf.mxu0
    %v596 = vadd.f32 %v551, %v595
    %v597 = vpop.f32.mrf.mxu0
    %598 = vmatprep.mubr.bf16.mxu0 0
    %599 = vmatmul.mubr.bf16.gmra.mxu0 %v546
    %v600 = vpop.f32.mrf.mxu0
    %v601 = vadd.f32 %v552, %v600
    %v602 = vpop.f32.mrf.mxu0
    %v603 = vpop.f32.mrf.mxu0
    %v604 = vadd.f32 %v553, %v603
    %v605 = vpop.f32.mrf.mxu0
    %606 = vmatprep.mubr.bf16.mxu0 0
    %607 = vmatmul.mubr.bf16.gmra.mxu0 %v547
    %v608 = vpop.f32.mrf.mxu0
    %v609 = vadd.f32 %v554, %v608
    %v610 = vpop.f32.mrf.mxu0
    %v611 = vpop.f32.mrf.mxu0
    %v612 = vadd.f32 %v555, %v611
    %v613 = vpop.f32.mrf.mxu0
    %614 = vmatprep.mubr.bf16.mxu0 0
    %615 = vmatmul.mubr.bf16.gmra.mxu0 %v548
    %v616 = vpop.f32.mrf.mxu0
    %v617 = vadd.f32 %v556, %v616
    %v618 = vpop.f32.mrf.mxu0
    %v619 = vpop.f32.mrf.mxu0
    %v620 = vadd.f32 %v557, %v619
    %v621 = vpop.f32.mrf.mxu0
    %622 = vdwg.mxu0
    %vm623 = vcmask 130048
    %v624 = vsel %vm623, %v593, -inf
    %625 = vmax.xlane.f32.xlu0 %v624
    %v626 = vpop.xlane.xlu0 %625
    %v627 = vsel %vm623, %v596, -inf
    %628 = vmax.xlane.f32.xlu0 %v627
    %v629 = vpop.xlane.xlu0 %628
    %v630 = vsel %vm623, %v601, -inf
    %631 = vmax.xlane.f32.xlu0 %v630
    %v632 = vpop.xlane.xlu0 %631
    %v633 = vsel %vm623, %v604, -inf
    %634 = vmax.xlane.f32.xlu0 %v633
    %v635 = vpop.xlane.xlu0 %634
    %v636 = vsel %vm623, %v609, -inf
    %637 = vmax.xlane.f32.xlu0 %v636
    %v638 = vpop.xlane.xlu0 %637
    %v639 = vsel %vm623, %v612, -inf
    %640 = vmax.xlane.f32.xlu0 %v639
    %v641 = vpop.xlane.xlu0 %640
    %v642 = vsel %vm623, %v617, -inf
    %643 = vmax.xlane.f32.xlu0 %v642
    %v644 = vpop.xlane.xlu0 %643
    %v645 = vsel %vm623, %v620, -inf
    %646 = vmax.xlane.f32.xlu0 %v645
    %v647 = vpop.xlane.xlu0 %646
    %v648 = vsub.f32 %v593, %v626
    %v649 = vsub.f32 %v596, %v629
    %v650 = vsub.f32 %v601, %v632
    %v651 = vsub.f32 %v604, %v635
    %v652 = vsub.f32 %v609, %v638
    %v653 = vsub.f32 %v612, %v641
    %v654 = vsub.f32 %v617, %v644
    %v655 = vsub.f32 %v620, %v647
    %v656 = vmul.f32 %v648, 1.442695
    %v657 = vpow.pop %v656
    %v658 = vmul.f32 %v649, 1.442695
    %v659 = vpow.pop %v658
    %v660 = vmul.f32 %v650, 1.442695
    %v661 = vpow.pop %v660
    %v662 = vmul.f32 %v651, 1.442695
    %v663 = vpow.pop %v662
    %v664 = vmul.f32 %v652, 1.442695
    %v665 = vpow.pop %v664
    %v666 = vmul.f32 %v653, 1.442695
    %v667 = vpow.pop %v666
    %v668 = vmul.f32 %v654, 1.442695
    %v669 = vpow.pop %v668
    %v670 = vmul.f32 %v655, 1.442695
    %v671 = vpow.pop %v670
    %v672 = vsel %vm623, %v657, 0.0
    %673 = vadd.xlane.f32.xlu0 %v672
    %v674 = vpop.xlane.xlu0 %673
    %v675 = vsel %vm623, %v659, 0.0
    %676 = vadd.xlane.f32.xlu0 %v675
    %v677 = vpop.xlane.xlu0 %676
    %v678 = vsel %vm623, %v661, 0.0
    %679 = vadd.xlane.f32.xlu0 %v678
    %v680 = vpop.xlane.xlu0 %679
    %v681 = vsel %vm623, %v663, 0.0
    %682 = vadd.xlane.f32.xlu0 %v681
    %v683 = vpop.xlane.xlu0 %682
    %v684 = vsel %vm623, %v665, 0.0
    %685 = vadd.xlane.f32.xlu0 %v684
    %v686 = vpop.xlane.xlu0 %685
    %v687 = vsel %vm623, %v667, 0.0
    %688 = vadd.xlane.f32.xlu0 %v687
    %v689 = vpop.xlane.xlu0 %688
    %v690 = vsel %vm623, %v669, 0.0
    %691 = vadd.xlane.f32.xlu0 %v690
    %v692 = vpop.xlane.xlu0 %691
    %v693 = vsel %vm623, %v671, 0.0
    %694 = vadd.xlane.f32.xlu0 %v693
    %v695 = vpop.xlane.xlu0 %694
    %v696 = vrcp.pop %v674
    %v697 = vrcp.pop %v677
    %v698 = vrcp.pop %v680
    %v699 = vrcp.pop %v683
    %v700 = vrcp.pop %v686
    %v701 = vrcp.pop %v689
    %v702 = vrcp.pop %v692
    %v703 = vrcp.pop %v695
    %v704 = vmul.f32 %v657, %v696
    %v705 = vmul.f32 %v659, %v697
    %v706 = vmul.f32 %v661, %v698
    %v707 = vmul.f32 %v663, %v699
    %v708 = vmul.f32 %v665, %v700
    %v709 = vmul.f32 %v667, %v701
    %v710 = vmul.f32 %v669, %v702
    %v711 = vmul.f32 %v671, %v703
    %v712 = vpack.c.bf16 %v705, %v704
    %v713 = vpack.c.bf16 %v707, %v706
    %v714 = vpack.c.bf16 %v709, %v708
    %v715 = vpack.c.bf16 %v711, %v710
    %v716 = vpack.c.bf16 %v468, %v464
    %v718 = vsel %vm623, %v712, 0
    %v721 = vsel %vm623, %v713, 0
    %v724 = vsel %vm623, %v714, 0
    %v727 = vsel %vm623, %v715, 0
    %729 = vmatprep.subr.bf16.mxu0 0
    %730 = vmatpush1.bf16.msra.mxu0 0
    %731 = vmatprep.subr.bf16.mxu0 0
    %732 = vmatpush1.bf16.msra.mxu0 0
    %733 = vmatprep.subr.bf16.mxu0 0
    %734 = vmatpush1.bf16.msra.mxu0 0
    %735 = vmatprep.subr.bf16.mxu0 0
    %736 = vmatpush1.bf16.msra.mxu0 0
    %737 = vmatprep.subr.bf16.mxu0 0
    %738 = vmatpush1.bf16.msra.mxu0 0
    %739 = vmatprep.subr.bf16.mxu0 0
    %740 = vmatpush1.bf16.msra.mxu0 0
    %741 = vmatprep.subr.bf16.mxu0 0
    %742 = vmatpush1.bf16.msra.mxu0 0
    %743 = vmatprep.subr.bf16.mxu0 0
    %744 = vmatpush1.bf16.msra.mxu0 %v716
    %745 = vmatprep.subr.bf16.mxu0 0
    %746 = vmatpush2.bf16.msra.mxu0 0
    %747 = vmatprep.subr.bf16.mxu0 0
    %748 = vmatpush2.bf16.msra.mxu0 0
    %749 = vmatprep.subr.bf16.mxu0 0
    %750 = vmatpush2.bf16.msra.mxu0 0
    %751 = vmatprep.subr.bf16.mxu0 0
    %752 = vmatpush2.bf16.msra.mxu0 0
    %753 = vmatprep.subr.bf16.mxu0 0
    %754 = vmatpush2.bf16.msra.mxu0 0
    %755 = vmatprep.subr.bf16.mxu0 0
    %756 = vmatpush2.bf16.msra.mxu0 0
    %757 = vmatprep.subr.bf16.mxu0 0
    %758 = vmatpush2.bf16.msra.mxu0 0
    %759 = vmatprep.subr.bf16.mxu0 0
    %760 = vmatpush2.bf16.msra.mxu0 0
    %761 = vmatprep.mubr.bf16.mxu0 0
    %762 = vmatmul.mubr.bf16.gmra.mxu0 %v718
    %v763 = vpop.f32.mrf.mxu0
    %v764 = vadd.f32 0.0, %v763
    %v765 = vpop.f32.mrf.mxu0
    %v766 = vpop.f32.mrf.mxu0
    %v767 = vadd.f32 0.0, %v766
    %v768 = vpop.f32.mrf.mxu0
    %769 = vmatprep.mubr.bf16.mxu0 0
    %770 = vmatmul.mubr.bf16.gmra.mxu0 %v721
    %v771 = vpop.f32.mrf.mxu0
    %v772 = vadd.f32 0.0, %v771
    %v773 = vpop.f32.mrf.mxu0
    %v774 = vpop.f32.mrf.mxu0
    %v775 = vadd.f32 0.0, %v774
    %v776 = vpop.f32.mrf.mxu0
    %777 = vmatprep.mubr.bf16.mxu0 0
    %778 = vmatmul.mubr.bf16.gmra.mxu0 %v724
    %v779 = vpop.f32.mrf.mxu0
    %v780 = vadd.f32 0.0, %v779
    %v781 = vpop.f32.mrf.mxu0
    %v782 = vpop.f32.mrf.mxu0
    %v783 = vadd.f32 0.0, %v782
    %v784 = vpop.f32.mrf.mxu0
    %785 = vmatprep.mubr.bf16.mxu0 0
    %786 = vmatmul.mubr.bf16.gmra.mxu0 %v727
    %v787 = vpop.f32.mrf.mxu0
    %v788 = vadd.f32 0.0, %v787
    %v789 = vpop.f32.mrf.mxu0
    %v790 = vpop.f32.mrf.mxu0
    %v791 = vadd.f32 0.0, %v790
    %v792 = vpop.f32.mrf.mxu0
    %793 = vdwg.mxu0
    %v794 = vmul.f32 %v764, %v529
    %v795 = vmul.f32 %v767, %v530
    %v796 = vmul.f32 %v772, %v531
    %v797 = vmul.f32 %v775, %v532
    %v798 = vmul.f32 %v780, %v533
    %v799 = vmul.f32 %v783, %v534
    %v800 = vmul.f32 %v788, %v535
    %v801 = vmul.f32 %v791, %v536
    %v802 = vadd.f32 %v794, %v796
    %v803 = vadd.f32 %v795, %v797
    %v804 = vadd.f32 %v802, %v798
    %v805 = vadd.f32 %v803, %v799
    %v806 = vadd.f32 %v804, %v800
    %v807 = vadd.f32 %v805, %v801
    %v808 = vpack.c.bf16 %v807, %v806
    %v809 = vld [vmem:[%s3] sm:$0xf]
    %v810 = vld [vmem:[%s3 + $0x4] sm:$0xf]
    %v811 = vld [vmem:[%s3 + $0x8] sm:$0xf]
    %v812 = vld [vmem:[%s3 + $0xc] sm:$0xf]
    %v813 = vld [vmem:[%s3 + $0x10] sm:$0xf]
    %v814 = vld [vmem:[%s3 + $0x14] sm:$0xf]
    %v815 = vld [vmem:[%s3 + $0x18] sm:$0xf]
    %v816 = vld [vmem:[%s3 + $0x1c] sm:$0xf]
    %v817 = vld [vmem:[%s3 + $0x20] sm:$0xf]
    %v818 = vld [vmem:[%s3 + $0x24] sm:$0xf]
    %v819 = vld [vmem:[%s3 + $0x28] sm:$0xf]
    %v820 = vld [vmem:[%s3 + $0x2c] sm:$0xf]
    %v821 = vld [vmem:[%s3 + $0x30] sm:$0xf]
    %v822 = vld [vmem:[%s3 + $0x34] sm:$0xf]
    %v823 = vld [vmem:[%s3 + $0x38] sm:$0xf]
    %v824 = vld [vmem:[%s3 + $0x3c] sm:$0xf]
    %v841 = vunpack.c.l.b16 %v809
    %v842 = vunpack.c.l.b16 %v810
    %v843 = vunpack.c.l.b16 %v811
    %v844 = vunpack.c.l.b16 %v812
    %v845 = vunpack.c.l.b16 %v813
    %v846 = vunpack.c.l.b16 %v814
    %v847 = vunpack.c.l.b16 %v815
    %v848 = vunpack.c.l.b16 %v816
    %v849 = vunpack.c.l.b16 %v817
    %v850 = vunpack.c.l.b16 %v818
    %v851 = vunpack.c.l.b16 %v819
    %v852 = vunpack.c.l.b16 %v820
    %v853 = vunpack.c.l.b16 %v821
    %v854 = vunpack.c.l.b16 %v822
    %v855 = vunpack.c.l.b16 %v823
    %v856 = vunpack.c.l.b16 %v824
    %v857 = vpack.c.b16 %v842, %v841
    %v858 = vpack.c.b16 %v844, %v843
    %v859 = vpack.c.b16 %v846, %v845
    %v860 = vpack.c.b16 %v848, %v847
    %v861 = vpack.c.b16 %v850, %v849
    %v862 = vpack.c.b16 %v852, %v851
    %v863 = vpack.c.b16 %v854, %v853
    %v864 = vpack.c.b16 %v856, %v855
    %873 = vmatprep.subr.bf16.mxu0 0
    %874 = vmatpush1.bf16.msra.mxu0 %v864
    %875 = vmatprep.subr.bf16.mxu0 0
    %876 = vmatpush1.bf16.msra.mxu0 %v863
    %877 = vmatprep.subr.bf16.mxu0 0
    %878 = vmatpush1.bf16.msra.mxu0 %v862
    %879 = vmatprep.subr.bf16.mxu0 0
    %880 = vmatpush1.bf16.msra.mxu0 %v861
    %881 = vmatprep.subr.bf16.mxu0 0
    %882 = vmatpush1.bf16.msra.mxu0 %v860
    %883 = vmatprep.subr.bf16.mxu0 0
    %884 = vmatpush1.bf16.msra.mxu0 %v859
    %885 = vmatprep.subr.bf16.mxu0 0
    %886 = vmatpush1.bf16.msra.mxu0 %v858
    %887 = vmatprep.subr.bf16.mxu0 0
    %888 = vmatpush1.bf16.msra.mxu0 %v857
    %889 = vmatprep.subr.bf16.mxu0 0
    %890 = vmatpush2.bf16.msra.mxu0 0
    %891 = vmatprep.subr.bf16.mxu0 0
    %892 = vmatpush2.bf16.msra.mxu0 0
    %893 = vmatprep.subr.bf16.mxu0 0
    %894 = vmatpush2.bf16.msra.mxu0 0
    %895 = vmatprep.subr.bf16.mxu0 0
    %896 = vmatpush2.bf16.msra.mxu0 0
    %897 = vmatprep.subr.bf16.mxu0 0
    %898 = vmatpush2.bf16.msra.mxu0 0
    %899 = vmatprep.subr.bf16.mxu0 0
    %900 = vmatpush2.bf16.msra.mxu0 0
    %901 = vmatprep.subr.bf16.mxu0 0
    %902 = vmatpush2.bf16.msra.mxu0 0
    %903 = vmatprep.subr.bf16.mxu0 0
    %904 = vmatpush2.bf16.msra.mxu0 0
    %905 = vmatprep.mubr.bf16.mxu0 0
    %906 = vmatmul.mubr.bf16.gmra.mxu0 %v808
    %v907 = vpop.f32.mrf.mxu0
    %v908 = vadd.f32 0.0, %v907
    %v909 = vpop.f32.mrf.mxu0
    %v910 = vpop.f32.mrf.mxu0
    %v911 = vadd.f32 0.0, %v910
    %v912 = vpop.f32.mrf.mxu0
    %913 = vdwg.mxu0
    %v914 = vadd.f32 %v105, %v908
    %v915 = vadd.f32 %v106, %v911
    %v916 = vmul.f32 %v914, %v914
    %v917 = vmul.f32 %v915, %v915
    %918 = vadd.xlane.f32.xlu0 %v916
    %v919 = vpop.xlane.xlu0 %918
    %920 = vadd.xlane.f32.xlu0 %v917
    %v921 = vpop.xlane.xlu0 %920
    %v922 = vmul.f32 %v919, %v114
    %v923 = vmul.f32 %v921, %v114
    %v924 = vadd.f32 %v922, 1e-05
    %v925 = vadd.f32 %v923, 1e-05
    %v926 = vrsqrt.pop %v924
    %v927 = vrsqrt.pop %v925
    %v928 = vmul.f32 %v914, %v926
    %v929 = vmul.f32 %v915, %v927
    %v930 = vlaneseq
    %v931 = vshrl.u32 %v930, 7
    %v932 = vsub.s32 1, %v931
    %v933 = vrot.slane %v107, %v932
    %v934 = vmul.f32 %v928, %v933
    %v935 = vmul.f32 %v929, %v933
    %v936 = vpack.c.bf16 %v935, %v934
    %v937 = vld [vmem:[#allocation7] sm:$0xff]
    %v938 = vld [vmem:[#allocation7 + $0x8] sm:$0xff]
    %v939 = vld [vmem:[#allocation7 + $0x10] sm:$0xff]
    %v940 = vld [vmem:[#allocation7 + $0x18] sm:$0xff]
    %v941 = vld [vmem:[#allocation7 + $0x20] sm:$0xff]
    %v942 = vld [vmem:[#allocation7 + $0x28] sm:$0xff]
    %v943 = vld [vmem:[#allocation7 + $0x30] sm:$0xff]
    %v944 = vld [vmem:[#allocation7 + $0x38] sm:$0xff]
    %v945 = vld [vmem:[#allocation7 + $0x40] sm:$0xff]
    %v946 = vld [vmem:[#allocation7 + $0x48] sm:$0xff]
    %v947 = vld [vmem:[#allocation7 + $0x50] sm:$0xff]
    %v948 = vld [vmem:[#allocation7 + $0x58] sm:$0xff]
    %v949 = vld [vmem:[#allocation7 + $0x60] sm:$0xff]
    %v950 = vld [vmem:[#allocation7 + $0x68] sm:$0xff]
    %v951 = vld [vmem:[#allocation7 + $0x70] sm:$0xff]
    %v952 = vld [vmem:[#allocation7 + $0x78] sm:$0xff]
    %v953 = vld [vmem:[#allocation7 + $0x80] sm:$0xff]
    %v954 = vld [vmem:[#allocation7 + $0x88] sm:$0xff]
    %v955 = vld [vmem:[#allocation7 + $0x90] sm:$0xff]
    %v956 = vld [vmem:[#allocation7 + $0x98] sm:$0xff]
    %v957 = vld [vmem:[#allocation7 + $0xa0] sm:$0xff]
    %v958 = vld [vmem:[#allocation7 + $0xa8] sm:$0xff]
    %v959 = vld [vmem:[#allocation7 + $0xb0] sm:$0xff]
    %v960 = vld [vmem:[#allocation7 + $0xb8] sm:$0xff]
    %v961 = vld [vmem:[#allocation7 + $0xc0] sm:$0xff]
    %v962 = vld [vmem:[#allocation7 + $0xc8] sm:$0xff]
    %v963 = vld [vmem:[#allocation7 + $0xd0] sm:$0xff]
    %v964 = vld [vmem:[#allocation7 + $0xd8] sm:$0xff]
    %v965 = vld [vmem:[#allocation7 + $0xe0] sm:$0xff]
    %v966 = vld [vmem:[#allocation7 + $0xe8] sm:$0xff]
    %v967 = vld [vmem:[#allocation7 + $0xf0] sm:$0xff]
    %v968 = vld [vmem:[#allocation7 + $0xf8] sm:$0xff]
    %v1001 = vunpack.c.l.b16 %v937
    %v1002 = vunpack.c.h.b16 %v937
    %v1003 = vunpack.c.l.b16 %v938
    %v1004 = vunpack.c.h.b16 %v938
    %v1005 = vunpack.c.l.b16 %v939
    %v1006 = vunpack.c.h.b16 %v939
    %v1007 = vunpack.c.l.b16 %v940
    %v1008 = vunpack.c.h.b16 %v940
    %v1009 = vunpack.c.l.b16 %v941
    %v1010 = vunpack.c.h.b16 %v941
    %v1011 = vunpack.c.l.b16 %v942
    %v1012 = vunpack.c.h.b16 %v942
    %v1013 = vunpack.c.l.b16 %v943
    %v1014 = vunpack.c.h.b16 %v943
    %v1015 = vunpack.c.l.b16 %v944
    %v1016 = vunpack.c.h.b16 %v944
    %v1017 = vunpack.c.l.b16 %v945
    %v1018 = vunpack.c.h.b16 %v945
    %v1019 = vunpack.c.l.b16 %v946
    %v1020 = vunpack.c.h.b16 %v946
    %v1021 = vunpack.c.l.b16 %v947
    %v1022 = vunpack.c.h.b16 %v947
    %v1023 = vunpack.c.l.b16 %v948
    %v1024 = vunpack.c.h.b16 %v948
    %v1025 = vunpack.c.l.b16 %v949
    %v1026 = vunpack.c.h.b16 %v949
    %v1027 = vunpack.c.l.b16 %v950
    %v1028 = vunpack.c.h.b16 %v950
    %v1029 = vunpack.c.l.b16 %v951
    %v1030 = vunpack.c.h.b16 %v951
    %v1031 = vunpack.c.l.b16 %v952
    %v1032 = vunpack.c.h.b16 %v952
    %v1033 = vunpack.c.l.b16 %v953
    %v1034 = vunpack.c.h.b16 %v953
    %v1035 = vunpack.c.l.b16 %v954
    %v1036 = vunpack.c.h.b16 %v954
    %v1037 = vunpack.c.l.b16 %v955
    %v1038 = vunpack.c.h.b16 %v955
    %v1039 = vunpack.c.l.b16 %v956
    %v1040 = vunpack.c.h.b16 %v956
    %v1041 = vunpack.c.l.b16 %v957
    %v1042 = vunpack.c.h.b16 %v957
    %v1043 = vunpack.c.l.b16 %v958
    %v1044 = vunpack.c.h.b16 %v958
    %v1045 = vunpack.c.l.b16 %v959
    %v1046 = vunpack.c.h.b16 %v959
    %v1047 = vunpack.c.l.b16 %v960
    %v1048 = vunpack.c.h.b16 %v960
    %v1049 = vunpack.c.l.b16 %v961
    %v1050 = vunpack.c.h.b16 %v961
    %v1051 = vunpack.c.l.b16 %v962
    %v1052 = vunpack.c.h.b16 %v962
    %v1053 = vunpack.c.l.b16 %v963
    %v1054 = vunpack.c.h.b16 %v963
    %v1055 = vunpack.c.l.b16 %v964
    %v1056 = vunpack.c.h.b16 %v964
    %v1057 = vunpack.c.l.b16 %v965
    %v1058 = vunpack.c.h.b16 %v965
    %v1059 = vunpack.c.l.b16 %v966
    %v1060 = vunpack.c.h.b16 %v966
    %v1061 = vunpack.c.l.b16 %v967
    %v1062 = vunpack.c.h.b16 %v967
    %v1063 = vunpack.c.l.b16 %v968
    %v1064 = vunpack.c.h.b16 %v968
    %v1065 = vpack.c.b16 %v1005, %v1001
    %v1066 = vpack.c.b16 %v1006, %v1002
    %v1067 = vpack.c.b16 %v1007, %v1003
    %v1068 = vpack.c.b16 %v1008, %v1004
    %v1069 = vpack.c.b16 %v1013, %v1009
    %v1070 = vpack.c.b16 %v1014, %v1010
    %v1071 = vpack.c.b16 %v1015, %v1011
    %v1072 = vpack.c.b16 %v1016, %v1012
    %v1073 = vpack.c.b16 %v1021, %v1017
    %v1074 = vpack.c.b16 %v1022, %v1018
    %v1075 = vpack.c.b16 %v1023, %v1019
    %v1076 = vpack.c.b16 %v1024, %v1020
    %v1077 = vpack.c.b16 %v1029, %v1025
    %v1078 = vpack.c.b16 %v1030, %v1026
    %v1079 = vpack.c.b16 %v1031, %v1027
    %v1080 = vpack.c.b16 %v1032, %v1028
    %v1081 = vpack.c.b16 %v1037, %v1033
    %v1082 = vpack.c.b16 %v1038, %v1034
    %v1083 = vpack.c.b16 %v1039, %v1035
    %v1084 = vpack.c.b16 %v1040, %v1036
    %v1085 = vpack.c.b16 %v1045, %v1041
    %v1086 = vpack.c.b16 %v1046, %v1042
    %v1087 = vpack.c.b16 %v1047, %v1043
    %v1088 = vpack.c.b16 %v1048, %v1044
    %v1089 = vpack.c.b16 %v1053, %v1049
    %v1090 = vpack.c.b16 %v1054, %v1050
    %v1091 = vpack.c.b16 %v1055, %v1051
    %v1092 = vpack.c.b16 %v1056, %v1052
    %v1093 = vpack.c.b16 %v1061, %v1057
    %v1094 = vpack.c.b16 %v1062, %v1058
    %v1095 = vpack.c.b16 %v1063, %v1059
    %v1096 = vpack.c.b16 %v1064, %v1060
    %1129 = vmatprep.subr.bf16.mxu0 %v1094
    %1130 = vmatpush1.bf16.msra.mxu0 %v1093
    %1131 = vmatprep.subr.bf16.mxu0 %v1090
    %1132 = vmatpush1.bf16.msra.mxu0 %v1089
    %1133 = vmatprep.subr.bf16.mxu0 %v1086
    %1134 = vmatpush1.bf16.msra.mxu0 %v1085
    %1135 = vmatprep.subr.bf16.mxu0 %v1082
    %1136 = vmatpush1.bf16.msra.mxu0 %v1081
    %1137 = vmatprep.subr.bf16.mxu0 %v1078
    %1138 = vmatpush1.bf16.msra.mxu0 %v1077
    %1139 = vmatprep.subr.bf16.mxu0 %v1074
    %1140 = vmatpush1.bf16.msra.mxu0 %v1073
    %1141 = vmatprep.subr.bf16.mxu0 %v1070
    %1142 = vmatpush1.bf16.msra.mxu0 %v1069
    %1143 = vmatprep.subr.bf16.mxu0 %v1066
    %1144 = vmatpush1.bf16.msra.mxu0 %v1065
    %1145 = vmatprep.subr.bf16.mxu0 0
    %1146 = vmatpush2.bf16.msra.mxu0 0
    %1147 = vmatprep.subr.bf16.mxu0 0
    %1148 = vmatpush2.bf16.msra.mxu0 0
    %1149 = vmatprep.subr.bf16.mxu0 0
    %1150 = vmatpush2.bf16.msra.mxu0 0
    %1151 = vmatprep.subr.bf16.mxu0 0
    %1152 = vmatpush2.bf16.msra.mxu0 0
    %1153 = vmatprep.subr.bf16.mxu0 0
    %1154 = vmatpush2.bf16.msra.mxu0 0
    %1155 = vmatprep.subr.bf16.mxu0 0
    %1156 = vmatpush2.bf16.msra.mxu0 0
    %1157 = vmatprep.subr.bf16.mxu0 0
    %1158 = vmatpush2.bf16.msra.mxu0 0
    %1159 = vmatprep.subr.bf16.mxu0 0
    %1160 = vmatpush2.bf16.msra.mxu0 0
    %1161 = vmatprep.mubr.bf16.mxu0 0
    %1162 = vmatmul.mubr.bf16.gmra.mxu0 %v936
    %v1163 = vpop.f32.mrf.mxu0
    %v1164 = vadd.f32 0.0, %v1163
    %v1165 = vpop.f32.mrf.mxu0
    %v1166 = vadd.f32 0.0, %v1165
    %v1167 = vpop.f32.mrf.mxu0
    %v1168 = vadd.f32 0.0, %v1167
    %v1169 = vpop.f32.mrf.mxu0
    %v1170 = vadd.f32 0.0, %v1169
    %1171 = vdwg.mxu0
    %1172 = vmatprep.subr.bf16.mxu0 %v1096
    %1173 = vmatpush1.bf16.msra.mxu0 %v1095
    %1174 = vmatprep.subr.bf16.mxu0 %v1092
    %1175 = vmatpush1.bf16.msra.mxu0 %v1091
    %1176 = vmatprep.subr.bf16.mxu0 %v1088
    %1177 = vmatpush1.bf16.msra.mxu0 %v1087
    %1178 = vmatprep.subr.bf16.mxu0 %v1084
    %1179 = vmatpush1.bf16.msra.mxu0 %v1083
    %1180 = vmatprep.subr.bf16.mxu0 %v1080
    %1181 = vmatpush1.bf16.msra.mxu0 %v1079
    %1182 = vmatprep.subr.bf16.mxu0 %v1076
    %1183 = vmatpush1.bf16.msra.mxu0 %v1075
    %1184 = vmatprep.subr.bf16.mxu0 %v1072
    %1185 = vmatpush1.bf16.msra.mxu0 %v1071
    %1186 = vmatprep.subr.bf16.mxu0 %v1068
    %1187 = vmatpush1.bf16.msra.mxu0 %v1067
    %1188 = vmatprep.subr.bf16.mxu0 0
    %1189 = vmatpush2.bf16.msra.mxu0 0
    %1190 = vmatprep.subr.bf16.mxu0 0
    %1191 = vmatpush2.bf16.msra.mxu0 0
    %1192 = vmatprep.subr.bf16.mxu0 0
    %1193 = vmatpush2.bf16.msra.mxu0 0
    %1194 = vmatprep.subr.bf16.mxu0 0
    %1195 = vmatpush2.bf16.msra.mxu0 0
    %1196 = vmatprep.subr.bf16.mxu0 0
    %1197 = vmatpush2.bf16.msra.mxu0 0
    %1198 = vmatprep.subr.bf16.mxu0 0
    %1199 = vmatpush2.bf16.msra.mxu0 0
    %1200 = vmatprep.subr.bf16.mxu0 0
    %1201 = vmatpush2.bf16.msra.mxu0 0
    %1202 = vmatprep.subr.bf16.mxu0 0
    %1203 = vmatpush2.bf16.msra.mxu0 0
    %1204 = vmatprep.mubr.bf16.mxu0 0
    %1205 = vmatmul.mubr.bf16.gmra.mxu0 %v936
    %v1206 = vpop.f32.mrf.mxu0
    %v1207 = vadd.f32 0.0, %v1206
    %v1208 = vpop.f32.mrf.mxu0
    %v1209 = vadd.f32 0.0, %v1208
    %v1210 = vpop.f32.mrf.mxu0
    %v1211 = vadd.f32 0.0, %v1210
    %v1212 = vpop.f32.mrf.mxu0
    %v1213 = vadd.f32 0.0, %v1212
    %1214 = vdwg.mxu0
    %v1215 = vxor.u32 %v1164, 2147483648
    %v1216 = vxor.u32 %v1166, 2147483648
    %v1217 = vxor.u32 %v1168, 2147483648
    %v1218 = vxor.u32 %v1170, 2147483648
    %v1219 = vmul.f32 %v1215, 1.442695
    %v1220 = vpow.pop %v1219
    %v1221 = vmul.f32 %v1216, 1.442695
    %v1222 = vpow.pop %v1221
    %v1223 = vmul.f32 %v1217, 1.442695
    %v1224 = vpow.pop %v1223
    %v1225 = vmul.f32 %v1218, 1.442695
    %v1226 = vpow.pop %v1225
    %v1227 = vadd.f32 %v1220, 1.0
    %v1228 = vadd.f32 %v1222, 1.0
    %v1229 = vadd.f32 %v1224, 1.0
    %v1230 = vadd.f32 %v1226, 1.0
    %v1231 = vrcp.pop %v1227
    %v1232 = vmul.f32 1.0, %v1231
    %v1233 = vrcp.pop %v1228
    %v1234 = vmul.f32 1.0, %v1233
    %v1235 = vrcp.pop %v1229
    %v1236 = vmul.f32 1.0, %v1235
    %v1237 = vrcp.pop %v1230
    %v1238 = vmul.f32 1.0, %v1237
    %v1239 = vmul.f32 %v1164, %v1232
    %v1240 = vmul.f32 %v1166, %v1234
    %v1241 = vmul.f32 %v1168, %v1236
    %v1242 = vmul.f32 %v1170, %v1238
    %v1243 = vmul.f32 %v1239, %v1207
    %v1244 = vmul.f32 %v1240, %v1209
    %v1245 = vmul.f32 %v1241, %v1211
    %v1246 = vmul.f32 %v1242, %v1213
    %v1247 = vpack.c.bf16 %v1245, %v1243
    %v1248 = vpack.c.bf16 %v1246, %v1244
    %v1249 = vld [vmem:[#allocation8] sm:$0xf]
    %v1250 = vld [vmem:[#allocation8 + $0x4] sm:$0xf]
    %v1251 = vld [vmem:[#allocation8 + $0x8] sm:$0xf]
    %v1252 = vld [vmem:[#allocation8 + $0xc] sm:$0xf]
    %v1253 = vld [vmem:[#allocation8 + $0x10] sm:$0xf]
    %v1254 = vld [vmem:[#allocation8 + $0x14] sm:$0xf]
    %v1255 = vld [vmem:[#allocation8 + $0x18] sm:$0xf]
    %v1256 = vld [vmem:[#allocation8 + $0x1c] sm:$0xf]
    %v1257 = vld [vmem:[#allocation8 + $0x20] sm:$0xf]
    %v1258 = vld [vmem:[#allocation8 + $0x24] sm:$0xf]
    %v1259 = vld [vmem:[#allocation8 + $0x28] sm:$0xf]
    %v1260 = vld [vmem:[#allocation8 + $0x2c] sm:$0xf]
    %v1261 = vld [vmem:[#allocation8 + $0x30] sm:$0xf]
    %v1262 = vld [vmem:[#allocation8 + $0x34] sm:$0xf]
    %v1263 = vld [vmem:[#allocation8 + $0x38] sm:$0xf]
    %v1264 = vld [vmem:[#allocation8 + $0x3c] sm:$0xf]
    %v1265 = vld [vmem:[#allocation8 + $0x40] sm:$0xf]
    %v1266 = vld [vmem:[#allocation8 + $0x44] sm:$0xf]
    %v1267 = vld [vmem:[#allocation8 + $0x48] sm:$0xf]
    %v1268 = vld [vmem:[#allocation8 + $0x4c] sm:$0xf]
    %v1269 = vld [vmem:[#allocation8 + $0x50] sm:$0xf]
    %v1270 = vld [vmem:[#allocation8 + $0x54] sm:$0xf]
    %v1271 = vld [vmem:[#allocation8 + $0x58] sm:$0xf]
    %v1272 = vld [vmem:[#allocation8 + $0x5c] sm:$0xf]
    %v1273 = vld [vmem:[#allocation8 + $0x60] sm:$0xf]
    %v1274 = vld [vmem:[#allocation8 + $0x64] sm:$0xf]
    %v1275 = vld [vmem:[#allocation8 + $0x68] sm:$0xf]
    %v1276 = vld [vmem:[#allocation8 + $0x6c] sm:$0xf]
    %v1277 = vld [vmem:[#allocation8 + $0x70] sm:$0xf]
    %v1278 = vld [vmem:[#allocation8 + $0x74] sm:$0xf]
    %v1279 = vld [vmem:[#allocation8 + $0x78] sm:$0xf]
    %v1280 = vld [vmem:[#allocation8 + $0x7c] sm:$0xf]
    %v1313 = vunpack.c.l.b16 %v1249
    %v1314 = vunpack.c.l.b16 %v1250
    %v1315 = vunpack.c.l.b16 %v1251
    %v1316 = vunpack.c.l.b16 %v1252
    %v1317 = vunpack.c.l.b16 %v1253
    %v1318 = vunpack.c.l.b16 %v1254
    %v1319 = vunpack.c.l.b16 %v1255
    %v1320 = vunpack.c.l.b16 %v1256
    %v1321 = vunpack.c.l.b16 %v1257
    %v1322 = vunpack.c.l.b16 %v1258
    %v1323 = vunpack.c.l.b16 %v1259
    %v1324 = vunpack.c.l.b16 %v1260
    %v1325 = vunpack.c.l.b16 %v1261
    %v1326 = vunpack.c.l.b16 %v1262
    %v1327 = vunpack.c.l.b16 %v1263
    %v1328 = vunpack.c.l.b16 %v1264
    %v1329 = vunpack.c.l.b16 %v1265
    %v1330 = vunpack.c.l.b16 %v1266
    %v1331 = vunpack.c.l.b16 %v1267
    %v1332 = vunpack.c.l.b16 %v1268
    %v1333 = vunpack.c.l.b16 %v1269
    %v1334 = vunpack.c.l.b16 %v1270
    %v1335 = vunpack.c.l.b16 %v1271
    %v1336 = vunpack.c.l.b16 %v1272
    %v1337 = vunpack.c.l.b16 %v1273
    %v1338 = vunpack.c.l.b16 %v1274
    %v1339 = vunpack.c.l.b16 %v1275
    %v1340 = vunpack.c.l.b16 %v1276
    %v1341 = vunpack.c.l.b16 %v1277
    %v1342 = vunpack.c.l.b16 %v1278
    %v1343 = vunpack.c.l.b16 %v1279
    %v1344 = vunpack.c.l.b16 %v1280
    %v1345 = vpack.c.b16 %v1314, %v1313
    %v1346 = vpack.c.b16 %v1316, %v1315
    %v1347 = vpack.c.b16 %v1318, %v1317
    %v1348 = vpack.c.b16 %v1320, %v1319
    %v1349 = vpack.c.b16 %v1322, %v1321
    %v1350 = vpack.c.b16 %v1324, %v1323
    %v1351 = vpack.c.b16 %v1326, %v1325
    %v1352 = vpack.c.b16 %v1328, %v1327
    %v1353 = vpack.c.b16 %v1330, %v1329
    %v1354 = vpack.c.b16 %v1332, %v1331
    %v1355 = vpack.c.b16 %v1334, %v1333
    %v1356 = vpack.c.b16 %v1336, %v1335
    %v1357 = vpack.c.b16 %v1338, %v1337
    %v1358 = vpack.c.b16 %v1340, %v1339
    %v1359 = vpack.c.b16 %v1342, %v1341
    %v1360 = vpack.c.b16 %v1344, %v1343
    %1377 = vmatprep.subr.bf16.mxu0 0
    %1378 = vmatpush1.bf16.msra.mxu0 %v1352
    %1379 = vmatprep.subr.bf16.mxu0 0
    %1380 = vmatpush1.bf16.msra.mxu0 %v1351
    %1381 = vmatprep.subr.bf16.mxu0 0
    %1382 = vmatpush1.bf16.msra.mxu0 %v1350
    %1383 = vmatprep.subr.bf16.mxu0 0
    %1384 = vmatpush1.bf16.msra.mxu0 %v1349
    %1385 = vmatprep.subr.bf16.mxu0 0
    %1386 = vmatpush1.bf16.msra.mxu0 %v1348
    %1387 = vmatprep.subr.bf16.mxu0 0
    %1388 = vmatpush1.bf16.msra.mxu0 %v1347
    %1389 = vmatprep.subr.bf16.mxu0 0
    %1390 = vmatpush1.bf16.msra.mxu0 %v1346
    %1391 = vmatprep.subr.bf16.mxu0 0
    %1392 = vmatpush1.bf16.msra.mxu0 %v1345
    %1393 = vmatprep.subr.bf16.mxu0 0
    %1394 = vmatpush2.bf16.msra.mxu0 %v1360
    %1395 = vmatprep.subr.bf16.mxu0 0
    %1396 = vmatpush2.bf16.msra.mxu0 %v1359
    %1397 = vmatprep.subr.bf16.mxu0 0
    %1398 = vmatpush2.bf16.msra.mxu0 %v1358
    %1399 = vmatprep.subr.bf16.mxu0 0
    %1400 = vmatpush2.bf16.msra.mxu0 %v1357
    %1401 = vmatprep.subr.bf16.mxu0 0
    %1402 = vmatpush2.bf16.msra.mxu0 %v1356
    %1403 = vmatprep.subr.bf16.mxu0 0
    %1404 = vmatpush2.bf16.msra.mxu0 %v1355
    %1405 = vmatprep.subr.bf16.mxu0 0
    %1406 = vmatpush2.bf16.msra.mxu0 %v1354
    %1407 = vmatprep.subr.bf16.mxu0 0
    %1408 = vmatpush2.bf16.msra.mxu0 %v1353
    %1409 = vmatprep.mubr.bf16.mxu0 %v1248
    %1410 = vmatmul.mubr.bf16.gmra.mxu0 %v1247
    %v1411 = vpop.f32.mrf.mxu0
    %v1412 = vadd.f32 0.0, %v1411
    %v1413 = vpop.f32.mrf.mxu0
    %v1414 = vpop.f32.mrf.mxu0
    %v1415 = vadd.f32 0.0, %v1414
    %v1416 = vpop.f32.mrf.mxu0
    %1417 = vdwg.mxu0
    %v1418 = vadd.f32 %v914, %v1412
    %v1419 = vadd.f32 %v915, %v1415
    %1420 = vst [vmem:[#allocation11] sm:$0xff] %v1418
    %1421 = vst [vmem:[#allocation11 + $0x8] sm:$0xff] %v1419
    // Predicated region
    $region62: #{transformer_block.1} parent=1 // pred_check
      _
    $region63: #{transformer_block.1} parent=1 // pred_check_branch
      %1423 = sbr.rel (0) target = $region65
    $region64: #{transformer_block.1} parent=1 // pred_region
      %s1425 = ssub.s32 256, 256
      %1426 = vsyncadd [#allocation4], %s1425
      %s1427 = sshll.u32 [#allocation11], 4
      %s1428 = int_to_ptr.vmem [resolvable:$true] %s1427
      %1433 = dma.vmem_to_hbm [thread:$0]  %s1428, 256, %s10, [#allocation4], 128, 128, 8
    $region65: #{transformer_block.1} parent=1 // pred_fallthru
      _
    // Predicated region
    $region66: #{transformer_block.1} parent=1 // pred_check
      _
    $region67: #{transformer_block.1} parent=1 // pred_check_branch
      %1435 = sbr.rel (0) target = $region69
    $region68: #{transformer_block.1} parent=1 // pred_region
      %1436 = dma.done [#allocation4], 256
    $region69: #{transformer_block.1} parent=1 // pred_fallthru
      _
    %1437 = vsyncpa [#allocation3], 1
    %1438 = vsyncpa [#allocation6], 1
    %1439 = vsyncpa [#allocation9], 1
    %1440 = vsyncpa [#allocation4], 1

</llo_original>
